<compile_context>
chip_gen: v7x
topology: tpu7x:2x2x1
jax: 0.10.0
libtpu: 0.0.40
codegen_flags: <defaults>
</compile_context>

<pallas_src>
import functools
import jax
import jax.numpy as jnp
from jax.experimental import pallas as pl
from jax.experimental.pallas import tpu as pltpu


def mha_kernel(x_full_ref, xq_ref, wq_ref, bq_ref, wk_ref, bk_ref, wv_ref, bv_ref,
               wp_ref, bp_ref, o_ref, k_sc, v_sc, *, num_heads, head_dim):
    nh, hd = num_heads, head_dim
    N = x_full_ref.shape[1]
    TQ = xq_ref.shape[1]
    E = nh * hd
    qi = pl.program_id(1)

    # ---- K / V projection: once per batch element (block index of x_full is constant
    #      over the q-tile axis, so it is DMA'd only when the batch element changes) ----
    @pl.when(qi == 0)
    def _project_kv():
        xf = x_full_ref[0]                                              # (N, E) bf16
        k = jnp.dot(xf, wk_ref[...], preferred_element_type=jnp.float32) + bk_ref[...]
        v = jnp.dot(xf, wv_ref[...], preferred_element_type=jnp.float32) + bv_ref[...]
        # head split: (N, E) -> (N, nh, hd) -> (nh, N, hd)
        k_sc[...] = k.reshape(N, nh, hd).transpose(1, 0, 2).astype(jnp.bfloat16)
        v_sc[...] = v.reshape(N, nh, hd).transpose(1, 0, 2).astype(jnp.bfloat16)

    # ---- Q projection for this query tile (hd**-0.5 scale pre-folded into wq/bq) ----
    q = jnp.dot(xq_ref[0], wq_ref[...], preferred_element_type=jnp.float32) + bq_ref[...]
    qh = q.reshape(TQ, nh, hd).transpose(1, 0, 2).astype(jnp.bfloat16)  # (nh, TQ, hd)

    # ---- attention: K/V fully resident -> exact softmax over full key rows ----
    s = jnp.einsum('hqd,hkd->hqk', qh, k_sc[...],
                   preferred_element_type=jnp.float32)                  # (nh, TQ, N)
    m = jnp.max(s, axis=-1, keepdims=True)
    p = jnp.exp(s - m)
    denom = jnp.sum(p, axis=-1, keepdims=True)
    # attn_drop: identity in eval mode
    # deferred normalisation: PV matmul on the unnormalised probabilities ...
    ctx = jnp.einsum('hqk,hkd->hqd', p.astype(jnp.bfloat16), v_sc[...],
                     preferred_element_type=jnp.float32)                # (nh, TQ, hd)
    # ... then a small (nh, TQ, hd) scale instead of an (nh, TQ, N) one.
    ctx = ctx * pl.reciprocal(denom, approx=True)

    # ---- output projection: merge heads and do one lane-dense (TQ,E)x(E,E) matmul ----
    ctx2 = ctx.transpose(1, 0, 2).reshape(TQ, E).astype(jnp.bfloat16)
    out = jnp.dot(ctx2, wp_ref[...], preferred_element_type=jnp.float32) + bp_ref[...]
    # proj_drop: identity in eval mode
    o_ref[0] = out.astype(o_ref.dtype)


def _vmem_budget_bytes():
    """Per-generation usable VMEM budget (~80% of physical), with a conservative fallback."""
    try:
        cap = int(pltpu.get_tpu_info().vmem_capacity_bytes)
    except Exception:
        cap = 64 * 1024 * 1024          # v7x-class per-core capacity as a safe floor
    return int(cap * 0.8)


def _pick_q_tile(N, num_heads, budget_bytes):
    """Query tile: whole sequence when small, otherwise the largest multiple-of-16 tile
    whose score/exp working set stays well inside the VMEM budget.  Awkward N is handled
    by padding the query axis (keys are never padded), not by a q_tile=N fallback."""
    if N <= 256:
        return N
    for t in (512, 256, 128, 64, 32, 16):
        # ~2 f32 + 1 bf16 resident copies of the (nh, t, N) score tensor
        if num_heads * t * N * (2 * 4 + 2) <= budget_bytes // 2:
            return t
    return 16


def _vmem_limit_bytes(N, E, nh, hd, q_tile, out_itemsize, budget):
    bf, f32 = 2, 4
    dbl = 2  # BlockSpec inputs/outputs are double-buffered by the pipeline
    weights = dbl * 4 * E * E * bf
    biases = dbl * 4 * E * f32
    x_full_blk = dbl * N * E * bf
    x_q_blk = dbl * q_tile * E * bf
    out_blk = dbl * q_tile * E * out_itemsize
    kv_scratch = 2 * nh * N * hd * bf
    work = (nh * q_tile * N * (2 * f32 + bf)      # s, exp(s-m), bf16 probs
            + 4 * N * E * f32                     # K/V projection temporaries (qi == 0)
            + 3 * nh * q_tile * hd * f32          # ctx + head-merge temporaries
            + 4 * q_tile * E * f32)               # q / ctx2 / out temporaries
    est = int(1.2 * (weights + biases + x_full_blk + x_q_blk + out_blk + kv_scratch + work))
    return min(max(est, 16 * 1024 * 1024), budget)


def prepare_params(params, *, num_heads):
    """One-time weight re-layout (do NOT call per forward): split qkv, cast to bf16,
    fold the hd**-0.5 attention scale into Wq / bq."""
    wqkv = params["wqkv"]          # (E, 3E), pre-transposed (in, out)
    bqkv = params["bqkv"]          # (3E,)
    wproj = params["wproj"]        # (E, E),  pre-transposed (in, out)
    bproj = params["bproj"]        # (E,)
    E = wproj.shape[0]
    hd = E // num_heads
    scale = hd ** -0.5
    return {
        "wq": (wqkv[:, 0 * E:1 * E] * scale).astype(jnp.bfloat16),
        "wk": wqkv[:, 1 * E:2 * E].astype(jnp.bfloat16),
        "wv": wqkv[:, 2 * E:3 * E].astype(jnp.bfloat16),
        "bq": (bqkv[0 * E:1 * E] * scale).astype(jnp.float32).reshape(1, E),
        "bk": bqkv[1 * E:2 * E].astype(jnp.float32).reshape(1, E),
        "bv": bqkv[2 * E:3 * E].astype(jnp.float32).reshape(1, E),
        "wp": wproj.astype(jnp.bfloat16),
        "bp": bproj.astype(jnp.float32).reshape(1, E),
    }


def multihead_attention(x, prepped, *, num_heads):
    B, N, E = x.shape
    assert E % num_heads == 0
    nh = num_heads
    hd = E // nh

    budget = _vmem_budget_bytes()
    q_tile = _pick_q_tile(N, nh, budget)
    q_tiles = pl.cdiv(N, q_tile)
    Np = q_tiles * q_tile

    x_bf = x.astype(jnp.bfloat16)
    # Keys/values always use the unpadded sequence; only the query axis is padded.
    x_q = x_bf if Np == N else jnp.pad(x_bf, ((0, 0), (0, Np - N), (0, 0)))

    kernel = functools.partial(mha_kernel, num_heads=nh, head_dim=hd)

    def const(shape):
        return pl.BlockSpec(shape, lambda b, qi: tuple(0 for _ in shape))

    in_specs = [
        pl.BlockSpec((1, N, E), lambda b, qi: (b, 0, 0)),        # x full seq (K/V source)
        pl.BlockSpec((1, q_tile, E), lambda b, qi: (b, qi, 0)),  # x query tile
        const((E, E)), const((1, E)),                            # wq (scaled), bq (scaled)
        const((E, E)), const((1, E)),                            # wk, bk
        const((E, E)), const((1, E)),                            # wv, bv
        const((E, E)), const((1, E)),                            # wproj, bproj
    ]
    out_spec = pl.BlockSpec((1, q_tile, E), lambda b, qi: (b, qi, 0))

    out = pl.pallas_call(
        kernel,
        out_shape=jax.ShapeDtypeStruct((B, Np, E), x.dtype),
        grid=(B, q_tiles),
        in_specs=in_specs,
        out_specs=out_spec,
        scratch_shapes=[
            pltpu.VMEM((nh, N, hd), jnp.bfloat16),   # K scratch (per batch element)
            pltpu.VMEM((nh, N, hd), jnp.bfloat16),   # V scratch
        ],
        compiler_params=pltpu.CompilerParams(
            dimension_semantics=("parallel", "arbitrary"),
            vmem_limit_bytes=_vmem_limit_bytes(N, E, nh, hd, q_tile,
                                               jnp.dtype(x.dtype).itemsize, budget),
        ),
    )(x_bf, x_q,
      prepped["wq"], prepped["bq"], prepped["wk"], prepped["bk"],
      prepped["wv"], prepped["bv"], prepped["wp"], prepped["bp"])

    return out if Np == N else out[:, :N, :]


def init_params(key, embed_dim):
    E = embed_dim
    ks = jax.random.split(key, 4)
    s = E ** -0.5
    return {
        # stored pre-transposed as (in, out); PyTorch nn.Linear stores (out, in)
        "wqkv": s * jax.random.normal(ks[0], (E, 3 * E), jnp.float32),
        "bqkv": s * jax.random.normal(ks[1], (3 * E,), jnp.float32),
        "wproj": s * jax.random.normal(ks[2], (E, E), jnp.float32),
        "bproj": s * jax.random.normal(ks[3], (E,), jnp.float32),
    }


def reference_mha(x, params, *, num_heads):
    # pure-JAX f32 reference matching the PyTorch module's forward (eval mode)
    B, N, E = x.shape
    hd = E // num_heads
    qkv = x @ params["wqkv"] + params["bqkv"]
    qkv = qkv.reshape(B, N, 3, num_heads, hd).transpose(2, 0, 3, 1, 4)
    q, k, v = qkv[0], qkv[1], qkv[2]                       # (B, nh, N, hd)
    attn = jax.nn.softmax((q @ jnp.swapaxes(k, -1, -2)) * hd ** -0.5, axis=-1)
    o = (attn @ v).transpose(0, 2, 1, 3).reshape(B, N, E)
    return o @ params["wproj"] + params["bproj"]


if __name__ == "__main__":
    B, N, E, num_heads = 2, 8, 32, 4
    key = jax.random.PRNGKey(0)
    kx, kp = jax.random.split(key)
    x = jax.random.normal(kx, (B, N, E), jnp.float32)
    params = init_params(kp, E)
    prepped = prepare_params(params, num_heads=num_heads)   # one-time weight prep

    out = multihead_attention(x, prepped, num_heads=num_heads)
    out = jax.block_until_ready(out)

    ref = reference_mha(x, params, num_heads=num_heads)
    assert out.shape == (B, N, E)
    err = float(jnp.max(jnp.abs(out - ref)))
    assert jnp.allclose(out, ref, atol=5e-2, rtol=5e-2), f"mismatch vs reference, max|diff|={err}"

    print("KERNEL_OK")
</pallas_src>

<mosaic_0001>
module attributes {stable_mosaic.version = 11 : i64} {
  func.func @mha_kernel(%arg0: i32, %arg1: i32, %arg2: memref<1x8x32xbf16, #tpu.memory_space<vmem>>, %arg3: memref<1x8x32xbf16, #tpu.memory_space<vmem>>, %arg4: memref<32x32xbf16, #tpu.memory_space<vmem>>, %arg5: memref<1x32xf32, #tpu.memory_space<vmem>>, %arg6: memref<32x32xbf16, #tpu.memory_space<vmem>>, %arg7: memref<1x32xf32, #tpu.memory_space<vmem>>, %arg8: memref<32x32xbf16, #tpu.memory_space<vmem>>, %arg9: memref<1x32xf32, #tpu.memory_space<vmem>>, %arg10: memref<32x32xbf16, #tpu.memory_space<vmem>>, %arg11: memref<1x32xf32, #tpu.memory_space<vmem>>, %arg12: memref<1x8x32xf32, #tpu.memory_space<vmem>>, %arg13: memref<4x8x8xbf16, #tpu.memory_space<vmem>>, %arg14: memref<4x8x8xbf16, #tpu.memory_space<vmem>>) attributes {dimension_semantics = [#tpu.dimension_semantics<parallel>, #tpu.dimension_semantics<arbitrary>], iteration_bounds = array<i64: 2, 1>, scalar_prefetch = 0 : i64, scratch_operands = 2 : i64, tpu.core_type = #tpu.core_type<tc>, window_params = [{transform_indices = @transform_0, window_bounds = array<i64: 1, 8, 32>}, {transform_indices = @transform_1, window_bounds = array<i64: 1, 8, 32>}, {pipeline_mode = #tpu.pipeline_mode<synchronous>, transform_indices = @transform_2, window_bounds = array<i64: 32, 32>}, {pipeline_mode = #tpu.pipeline_mode<synchronous>, transform_indices = @transform_3, window_bounds = array<i64: 1, 32>}, {pipeline_mode = #tpu.pipeline_mode<synchronous>, transform_indices = @transform_4, window_bounds = array<i64: 32, 32>}, {pipeline_mode = #tpu.pipeline_mode<synchronous>, transform_indices = @transform_5, window_bounds = array<i64: 1, 32>}, {pipeline_mode = #tpu.pipeline_mode<synchronous>, transform_indices = @transform_6, window_bounds = array<i64: 32, 32>}, {pipeline_mode = #tpu.pipeline_mode<synchronous>, transform_indices = @transform_7, window_bounds = array<i64: 1, 32>}, {pipeline_mode = #tpu.pipeline_mode<synchronous>, transform_indices = @transform_8, window_bounds = array<i64: 32, 32>}, {pipeline_mode = #tpu.pipeline_mode<synchronous>, transform_indices = @transform_9, window_bounds = array<i64: 1, 32>}, {transform_indices = @transform_10, window_bounds = array<i64: 1, 8, 32>}]} {
    %c0_i32 = arith.constant 0 : i32
    %0 = arith.cmpi eq, %arg1, %c0_i32 : i32
    %1 = arith.extui %0 : i1 to i32
    %c0_i32_0 = arith.constant 0 : i32
    %2 = arith.cmpi ne, %1, %c0_i32_0 : i32
    scf.if %2 {
      %c0_25 = arith.constant 0 : index
      %c0_26 = arith.constant 0 : index
      %c0_27 = arith.constant 0 : index
      %39 = vector.load %arg2[%c0_25, %c0_26, %c0_27] : memref<1x8x32xbf16, #tpu.memory_space<vmem>>, vector<1x8x32xbf16>
      %40 = vector.shape_cast %39 : vector<1x8x32xbf16> to vector<8x32xbf16>
      %c0_28 = arith.constant 0 : index
      %c0_29 = arith.constant 0 : index
      %41 = vector.load %arg6[%c0_28, %c0_29] : memref<32x32xbf16, #tpu.memory_space<vmem>>, vector<32x32xbf16>
      %cst_30 = arith.constant dense<0.000000e+00> : vector<8x32xf32>
      %42 = tpu.matmul %40, %41, %cst_30 {dimension_numbers = #tpu.dot_dimension_numbers<[1], [0], [0], [1], [0, 0, 1, 1], [], []>} : vector<8x32xbf16>, vector<32x32xbf16>, vector<8x32xf32> -> vector<8x32xf32>
      %c0_31 = arith.constant 0 : index
      %c0_32 = arith.constant 0 : index
      %43 = vector.load %arg7[%c0_31, %c0_32] : memref<1x32xf32, #tpu.memory_space<vmem>>, vector<1x32xf32>
      %44 = vector.broadcast %43 : vector<1x32xf32> to vector<8x32xf32>
      %45 = arith.addf %42, %44 : vector<8x32xf32>
      %c0_33 = arith.constant 0 : index
      %c0_34 = arith.constant 0 : index
      %46 = vector.load %arg8[%c0_33, %c0_34] : memref<32x32xbf16, #tpu.memory_space<vmem>>, vector<32x32xbf16>
      %cst_35 = arith.constant dense<0.000000e+00> : vector<8x32xf32>
      %47 = tpu.matmul %40, %46, %cst_35 {dimension_numbers = #tpu.dot_dimension_numbers<[1], [0], [0], [1], [0, 0, 1, 1], [], []>} : vector<8x32xbf16>, vector<32x32xbf16>, vector<8x32xf32> -> vector<8x32xf32>
      %c0_36 = arith.constant 0 : index
      %c0_37 = arith.constant 0 : index
      %48 = vector.load %arg9[%c0_36, %c0_37] : memref<1x32xf32, #tpu.memory_space<vmem>>, vector<1x32xf32>
      %49 = vector.broadcast %48 : vector<1x32xf32> to vector<8x32xf32>
      %50 = arith.addf %47, %49 : vector<8x32xf32>
      %51 = vector.shape_cast %45 : vector<8x32xf32> to vector<8x4x8xf32>
      %52 = tpu.transpose %51, [1, 0, 2] : vector<8x4x8xf32> -> vector<4x8x8xf32>
      %53 = arith.truncf %52 : vector<4x8x8xf32> to vector<4x8x8xbf16>
      %c0_38 = arith.constant 0 : index
      %c0_39 = arith.constant 0 : index
      %c0_40 = arith.constant 0 : index
      %54 = vector.load %arg13[%c0_38, %c0_39, %c0_40] : memref<4x8x8xbf16, #tpu.memory_space<vmem>>, vector<4x8x8xbf16>
      tpu.vector_store %arg13[%c0_38, %c0_39, %c0_40], %53 {strides = array<i32>} : memref<4x8x8xbf16, #tpu.memory_space<vmem>>, vector<4x8x8xbf16>,
      %55 = vector.shape_cast %50 : vector<8x32xf32> to vector<8x4x8xf32>
      %56 = tpu.transpose %55, [1, 0, 2] : vector<8x4x8xf32> -> vector<4x8x8xf32>
      %57 = arith.truncf %56 : vector<4x8x8xf32> to vector<4x8x8xbf16>
      %c0_41 = arith.constant 0 : index
      %c0_42 = arith.constant 0 : index
      %c0_43 = arith.constant 0 : index
      %58 = vector.load %arg14[%c0_41, %c0_42, %c0_43] : memref<4x8x8xbf16, #tpu.memory_space<vmem>>, vector<4x8x8xbf16>
      tpu.vector_store %arg14[%c0_41, %c0_42, %c0_43], %57 {strides = array<i32>} : memref<4x8x8xbf16, #tpu.memory_space<vmem>>, vector<4x8x8xbf16>,
    } else {
    }
    %c0 = arith.constant 0 : index
    %c0_1 = arith.constant 0 : index
    %c0_2 = arith.constant 0 : index
    %3 = vector.load %arg3[%c0, %c0_1, %c0_2] : memref<1x8x32xbf16, #tpu.memory_space<vmem>>, vector<1x8x32xbf16>
    %4 = vector.shape_cast %3 : vector<1x8x32xbf16> to vector<8x32xbf16>
    %c0_3 = arith.constant 0 : index
    %c0_4 = arith.constant 0 : index
    %5 = vector.load %arg4[%c0_3, %c0_4] : memref<32x32xbf16, #tpu.memory_space<vmem>>, vector<32x32xbf16>
    %cst = arith.constant dense<0.000000e+00> : vector<8x32xf32>
    %6 = tpu.matmul %4, %5, %cst {dimension_numbers = #tpu.dot_dimension_numbers<[1], [0], [0], [1], [0, 0, 1, 1], [], []>} : vector<8x32xbf16>, vector<32x32xbf16>, vector<8x32xf32> -> vector<8x32xf32>
    %c0_5 = arith.constant 0 : index
    %c0_6 = arith.constant 0 : index
    %7 = vector.load %arg5[%c0_5, %c0_6] : memref<1x32xf32, #tpu.memory_space<vmem>>, vector<1x32xf32>
    %8 = vector.broadcast %7 : vector<1x32xf32> to vector<8x32xf32>
    %9 = arith.addf %6, %8 : vector<8x32xf32>
    %10 = vector.shape_cast %9 : vector<8x32xf32> to vector<8x4x8xf32>
    %11 = tpu.transpose %10, [1, 0, 2] : vector<8x4x8xf32> -> vector<4x8x8xf32>
    %12 = arith.truncf %11 : vector<4x8x8xf32> to vector<4x8x8xbf16>
    %c0_7 = arith.constant 0 : index
    %c0_8 = arith.constant 0 : index
    %c0_9 = arith.constant 0 : index
    %13 = vector.load %arg13[%c0_7, %c0_8, %c0_9] : memref<4x8x8xbf16, #tpu.memory_space<vmem>>, vector<4x8x8xbf16>
    "tpu.trace_start"() <{level = 10 : i32, message = "hqd,hkd->hqk"}> : () -> ()
    %cst_10 = arith.constant dense<0.000000e+00> : vector<4x8x8xf32>
    %14 = tpu.matmul %12, %13, %cst_10 {dimension_numbers = #tpu.dot_dimension_numbers<[2], [2], [1], [1], [0, 0, 0, 1, 1, 1], [0], [0]>} : vector<4x8x8xbf16>, vector<4x8x8xbf16>, vector<4x8x8xf32> -> vector<4x8x8xf32>
    "tpu.trace_stop"() : () -> ()
    %cst_11 = arith.constant dense<0xFF800000> : vector<4x8xf32>
    %15 = vector.multi_reduction <maximumf>, %14, %cst_11 [2] : vector<4x8x8xf32> to vector<4x8xf32>
    %16 = vector.shape_cast %15 : vector<4x8xf32> to vector<4x8x1xf32>
    %17 = vector.broadcast %16 : vector<4x8x1xf32> to vector<4x8x8xf32>
    %18 = arith.subf %14, %17 : vector<4x8x8xf32>
    %19 = math.exp %18 : vector<4x8x8xf32>
    %cst_12 = arith.constant dense<0.000000e+00> : vector<4x8xf32>
    %20 = vector.multi_reduction <add>, %19, %cst_12 [2] : vector<4x8x8xf32> to vector<4x8xf32>
    %21 = vector.shape_cast %20 : vector<4x8xf32> to vector<4x8x1xf32>
    %22 = arith.truncf %19 : vector<4x8x8xf32> to vector<4x8x8xbf16>
    %c0_13 = arith.constant 0 : index
    %c0_14 = arith.constant 0 : index
    %c0_15 = arith.constant 0 : index
    %23 = vector.load %arg14[%c0_13, %c0_14, %c0_15] : memref<4x8x8xbf16, #tpu.memory_space<vmem>>, vector<4x8x8xbf16>
    "tpu.trace_start"() <{level = 10 : i32, message = "hqk,hkd->hqd"}> : () -> ()
    %cst_16 = arith.constant dense<0.000000e+00> : vector<4x8x8xf32>
    %24 = tpu.matmul %22, %23, %cst_16 {dimension_numbers = #tpu.dot_dimension_numbers<[2], [1], [1], [2], [0, 0, 0, 1, 1, 2], [0], [0]>} : vector<4x8x8xbf16>, vector<4x8x8xbf16>, vector<4x8x8xf32> -> vector<4x8x8xf32>
    "tpu.trace_stop"() : () -> ()
    %25 = tpu.reciprocal %21 {approx = true} : vector<4x8x1xf32> -> vector<4x8x1xf32>
    %26 = vector.broadcast %25 : vector<4x8x1xf32> to vector<4x8x8xf32>
    %27 = arith.mulf %24, %26 : vector<4x8x8xf32>
    %28 = tpu.transpose %27, [1, 0, 2] : vector<4x8x8xf32> -> vector<8x4x8xf32>
    %29 = vector.shape_cast %28 : vector<8x4x8xf32> to vector<8x32xf32>
    %30 = arith.truncf %29 : vector<8x32xf32> to vector<8x32xbf16>
    %c0_17 = arith.constant 0 : index
    %c0_18 = arith.constant 0 : index
    %31 = vector.load %arg10[%c0_17, %c0_18] : memref<32x32xbf16, #tpu.memory_space<vmem>>, vector<32x32xbf16>
    %cst_19 = arith.constant dense<0.000000e+00> : vector<8x32xf32>
    %32 = tpu.matmul %30, %31, %cst_19 {dimension_numbers = #tpu.dot_dimension_numbers<[1], [0], [0], [1], [0, 0, 1, 1], [], []>} : vector<8x32xbf16>, vector<32x32xbf16>, vector<8x32xf32> -> vector<8x32xf32>
    %c0_20 = arith.constant 0 : index
    %c0_21 = arith.constant 0 : index
    %33 = vector.load %arg11[%c0_20, %c0_21] : memref<1x32xf32, #tpu.memory_space<vmem>>, vector<1x32xf32>
    %34 = vector.broadcast %33 : vector<1x32xf32> to vector<8x32xf32>
    %35 = arith.addf %32, %34 : vector<8x32xf32>
    %c0_22 = arith.constant 0 : index
    %c0_23 = arith.constant 0 : index
    %c0_24 = arith.constant 0 : index
    %36 = vector.load %arg12[%c0_22, %c0_23, %c0_24] : memref<1x8x32xf32, #tpu.memory_space<vmem>>, vector<1x8x32xf32>
    %37 = vector.shape_cast %36 : vector<1x8x32xf32> to vector<8x32xf32>
    %38 = vector.shape_cast %35 : vector<8x32xf32> to vector<1x8x32xf32>
    tpu.vector_store %arg12[%c0_22, %c0_23, %c0_24], %38 {strides = array<i32>} : memref<1x8x32xf32, #tpu.memory_space<vmem>>, vector<1x8x32xf32>,
    return
  }
  func.func @transform_0(%arg0: i32, %arg1: i32) -> (i32, i32, i32) {
    %c0_i32 = arith.constant 0 : i32
    %c0_i32_0 = arith.constant 0 : i32
    %c0_i32_1 = arith.constant 0 : i32
    return %arg0, %c0_i32, %c0_i32_0 : i32, i32, i32
  }
  func.func @transform_1(%arg0: i32, %arg1: i32) -> (i32, i32, i32) {
    %c0_i32 = arith.constant 0 : i32
    %c0_i32_0 = arith.constant 0 : i32
    return %arg0, %arg1, %c0_i32 : i32, i32, i32
  }
  func.func @transform_2(%arg0: i32, %arg1: i32) -> (i32, i32) {
    %c0_i32 = arith.constant 0 : i32
    %c0_i32_0 = arith.constant 0 : i32
    %c0_i32_1 = arith.constant 0 : i32
    return %c0_i32, %c0_i32_0 : i32, i32
  }
  func.func @transform_3(%arg0: i32, %arg1: i32) -> (i32, i32) {
    %c0_i32 = arith.constant 0 : i32
    %c0_i32_0 = arith.constant 0 : i32
    %c0_i32_1 = arith.constant 0 : i32
    return %c0_i32, %c0_i32_0 : i32, i32
  }
  func.func @transform_4(%arg0: i32, %arg1: i32) -> (i32, i32) {
    %c0_i32 = arith.constant 0 : i32
    %c0_i32_0 = arith.constant 0 : i32
    %c0_i32_1 = arith.constant 0 : i32
    return %c0_i32, %c0_i32_0 : i32, i32
  }
  func.func @transform_5(%arg0: i32, %arg1: i32) -> (i32, i32) {
    %c0_i32 = arith.constant 0 : i32
    %c0_i32_0 = arith.constant 0 : i32
    %c0_i32_1 = arith.constant 0 : i32
    return %c0_i32, %c0_i32_0 : i32, i32
  }
  func.func @transform_6(%arg0: i32, %arg1: i32) -> (i32, i32) {
    %c0_i32 = arith.constant 0 : i32
    %c0_i32_0 = arith.constant 0 : i32
    %c0_i32_1 = arith.constant 0 : i32
    return %c0_i32, %c0_i32_0 : i32, i32
  }
  func.func @transform_7(%arg0: i32, %arg1: i32) -> (i32, i32) {
    %c0_i32 = arith.constant 0 : i32
    %c0_i32_0 = arith.constant 0 : i32
    %c0_i32_1 = arith.constant 0 : i32
    return %c0_i32, %c0_i32_0 : i32, i32
  }
  func.func @transform_8(%arg0: i32, %arg1: i32) -> (i32, i32) {
    %c0_i32 = arith.constant 0 : i32
    %c0_i32_0 = arith.constant 0 : i32
    %c0_i32_1 = arith.constant 0 : i32
    return %c0_i32, %c0_i32_0 : i32, i32
  }
  func.func @transform_9(%arg0: i32, %arg1: i32) -> (i32, i32) {
    %c0_i32 = arith.constant 0 : i32
    %c0_i32_0 = arith.constant 0 : i32
    %c0_i32_1 = arith.constant 0 : i32
    return %c0_i32, %c0_i32_0 : i32, i32
  }
  func.func @transform_10(%arg0: i32, %arg1: i32) -> (i32, i32, i32) {
    %c0_i32 = arith.constant 0 : i32
    %c0_i32_0 = arith.constant 0 : i32
    return %arg0, %arg1, %c0_i32 : i32, i32, i32
  }
}

</mosaic_0001>

<llo_original>
// kernel: tpu_custom_call.1
$region0: #{tpu_custom_call.1}
  #allocation0 [shape = 'u32[]', space=smem, size = 0x4, offset = 0x4, fixed_abs, tag = 'smem constant byte address 0x4 - core index']
  #allocation1 [shape = 'u32[144,128]{1,0:T(1,128)}', space=vmem, size = 0x12000, scoped, tag = 'internal scratch']
  #allocation2 [shape = 'bf16[4,8,8]{2,1,0:T(8,128)(2,1)}', space=vmem, size = 0x2000, scoped, tag = 'scratch operand']
  #allocation3 [shape = 'bf16[4,8,8]{2,1,0:T(8,128)(2,1)}', space=vmem, size = 0x2000, scoped, tag = 'scratch operand']
  %s0 = inlined_call_operand.hbm [shape: bf16[2,8,32], index: 0, kind: input, shape index: {}]
  %s1 = inlined_call_operand.hbm [shape: bf16[2,8,32], index: 1, kind: input, shape index: {}]
  %s2 = inlined_call_operand.hbm [shape: bf16[32,32], index: 2, kind: input, shape index: {}]
  %s3 = inlined_call_operand.vmem [shape: f32[1,32], index: 3, kind: input, shape index: {}]
  %s4 = inlined_call_operand.hbm [shape: bf16[32,32], index: 4, kind: input, shape index: {}]
  %s5 = inlined_call_operand.vmem [shape: f32[1,32], index: 5, kind: input, shape index: {}]
  %s6 = inlined_call_operand.vmem [shape: bf16[32,32], index: 6, kind: input, shape index: {}]
  %s7 = inlined_call_operand.vmem [shape: f32[1,32], index: 7, kind: input, shape index: {}]
  %s8 = inlined_call_operand.hbm [shape: bf16[32,32], index: 8, kind: input, shape index: {}]
  %s9 = inlined_call_operand.vmem [shape: f32[1,32], index: 9, kind: input, shape index: {}]
  %s10 = inlined_call_operand.hbm [shape: f32[2,8,32], index: 10, kind: output, shape index: {}]
  %s11 = sld [smem:[#allocation0]]
  $region97: #{tpu_custom_call.1} parent=0
    _
  %s13 = ssub.s32 1, %s11
  %s14 = scalar_select 0, %s13, %s11
  $region1: #{tpu_custom_call.1} parent=0
    #allocation4 [shape = 'u8[4096]{0}', space=vmem, size = 0x1000, scoped, tag = 'input window, operand 0']
    #allocation5 [shape = 's32[2]{0}', space=sflag, size = 0x8, scoped, tag = 'scoped memory for tpu_custom_call.1']
    #allocation6 [shape = 's32[2]{0}', space=sflag, size = 0x8, scoped, tag = 'scoped memory for tpu_custom_call.1']
    #allocation7 [shape = 'u8[4096]{0}', space=vmem, size = 0x1000, scoped, tag = 'input window, operand 1']
    #allocation8 [shape = 's32[2]{0}', space=sflag, size = 0x8, scoped, tag = 'scoped memory for tpu_custom_call.1']
    #allocation9 [shape = 'u8[8192]{0}', space=vmem, size = 0x2000, scoped, tag = 'input window, operand 2, single buffered']
    #allocation10 [shape = 'u8[8192]{0}', space=vmem, size = 0x2000, scoped, tag = 'input window, operand 4, single buffered']
    #allocation11 [shape = 's32[1]{0}', space=sflag, size = 0x4, scoped, tag = 'scoped memory for tpu_custom_call.1']
    #allocation12 [shape = 'u8[8192]{0}', space=vmem, size = 0x2000, scoped, tag = 'input window, operand 8, single buffered']
    #allocation13 [shape = 'u8[8192]{0}', space=vmem, size = 0x2000, scoped, tag = 'output window, operand 0']
    %15 = vsyncpa [#allocation5], 0
    %s16 = scalar_lea.sflag [#allocation5], 1
    %17 = vsyncpa %s16, 0
    %18 = vsyncpa [#allocation8], 0
    %s19 = scalar_lea.sflag [#allocation8], 1
    %20 = vsyncpa %s19, 0
    %21 = vsyncpa [#allocation11], 0
    %22 = vsyncpa [#allocation6], 0
    %s23 = scalar_lea.sflag [#allocation6], 1
    %24 = vsyncpa %s23, 0
    loop: start=0, step=1, limit=4
    $region2: #{tpu_custom_call.1} parent=1 // loop_pre_header
      _
    $region3: #{tpu_custom_call.1} parent=1 // loop_header
      %s26 = sphi 0, %s30
      %p27 = scmp.ge.s32.totalorder %s26, 4
      %s33 = sphi 0, %s45
      %s34 = sphi 0, %s41
      %s35 = sphi 0, %s33
      %s36 = sphi 0, %s34
      %s37 = sphi 0, %s35
      %s38 = sphi 0, %s36
      %s48 = sphi 0, %s50
      %s51 = sphi 0, %s48
      %s52 = sphi 0, %s51
      %s68 = sphi 0, %s52
      %s76 = sphi 0, %s78
      %s79 = sphi 0, %s76
      %s80 = sphi 0, %s79
      %s96 = sphi 0, %s80
      %s100 = sphi 0, %s100
      %s102 = sphi 0, %s100
      %s103 = sphi 0, %s102
      %s117 = sphi 0, %s103
      %s121 = sphi 0, %s121
      %s123 = sphi 0, %s121
      %s124 = sphi 0, %s123
      %s138 = sphi 0, %s124
      %s142 = sphi 0, %s142
      %s144 = sphi 0, %s142
      %s145 = sphi 0, %s144
      %s159 = sphi 0, %s145
      %s163 = sphi 0, %s163
      %s165 = sphi 0, %s163
      %s166 = sphi 0, %s165
      %s180 = sphi 0, %s166
      %s184 = sphi 0, %s184
      %s186 = sphi 0, %s184
      %s187 = sphi 0, %s186
      %s201 = sphi 0, %s187
      %s205 = sphi 0, %s205
      %s207 = sphi 0, %s205
      %s208 = sphi 0, %s207
      %s222 = sphi 0, %s208
      %s226 = sphi 0, %s226
      %s228 = sphi 0, %s226
      %s229 = sphi 0, %s228
      %s243 = sphi 0, %s229
      %s247 = sphi 0, %s247
      %s249 = sphi 0, %s247
      %s250 = sphi 0, %s249
      %s264 = sphi 0, %s250
      %s272 = sphi 0, %s274
      %s275 = sphi 0, %s272
      %s276 = sphi 0, %s275
      %s292 = sphi 0, %s276
    $region4: #{tpu_custom_call.1} parent=1 // loop_header_branch
      %29 = sbr.rel (%p27) target = $region8
    $region5: #{tpu_custom_call.1} parent=1 // loop_body
      %s31 = ssub.s32 %s26, 1
      %s32 = ssub.s32 %s26, 2
      %s39 = sadd.s32 1, %s34
      %p40 = scmp.ge.s32.totalorder %s39, 1
      %s41 = scalar_select %p40, 0, %s39
      %s42 = sadd.s32 1, %s33
      %s43 = scalar_select %p40, %s42, %s33
      %p44 = scmp.ge.s32.totalorder %s43, 2
      %s45 = scalar_select %p44, 0, %s43
      %s46 = ssub.s32 %s33, %s45
      %p47 = scmp.eq.s32.totalorder %s46, 0
      %s49 = sadd.s32 %s48, 1
      %s50 = scalar_select %p47, %s48, %s49
      %p53 = pneg %p47
      %p54 = scmp.eq.s32.totalorder %s26, 1
      %p55 = por %p53, %p54
      %p56 = scmp.ne.s32.totalorder %s48, %s51
      %p57 = scmp.eq.s32.totalorder %s26, 0
      %p58 = por %p56, %p57
      %p59 = scmp.ne.s32.totalorder %s48, %s51
      %p60 = scmp.eq.s32.totalorder %s31, 1
      %p61 = por %p59, %p60
      %p62 = scmp.ne.s32.totalorder %s51, %s52
      %p63 = scmp.eq.s32.totalorder %s31, 0
      %p64 = por %p62, %p63
      %p65 = scmp.ne.s32.totalorder %s51, %s52
      %p66 = scmp.eq.s32.totalorder %s32, 1
      %p67 = por %p65, %p66
      %p69 = scmp.ne.s32.totalorder %s52, %s68
      %p70 = scmp.eq.s32.totalorder %s32, 0
      %p71 = por %p69, %p70
      %s72 = ssub.s32 %s33, %s45
      %s73 = ssub.s32 %s34, %s41
      %s74 = sor.u32 %s72, %s73
      %p75 = scmp.eq.s32.totalorder %s74, 0
      %s77 = sadd.s32 %s76, 1
      %s78 = scalar_select %p75, %s76, %s77
      %p81 = pneg %p75
      %p82 = scmp.eq.s32.totalorder %s26, 1
      %p83 = por %p81, %p82
      %p84 = scmp.ne.s32.totalorder %s76, %s79
      %p85 = scmp.eq.s32.totalorder %s26, 0
      %p86 = por %p84, %p85
      %p87 = scmp.ne.s32.totalorder %s76, %s79
      %p88 = scmp.eq.s32.totalorder %s31, 1
      %p89 = por %p87, %p88
      %p90 = scmp.ne.s32.totalorder %s79, %s80
      %p91 = scmp.eq.s32.totalorder %s31, 0
      %p92 = por %p90, %p91
      %p93 = scmp.ne.s32.totalorder %s79, %s80
      %p94 = scmp.eq.s32.totalorder %s32, 1
      %p95 = por %p93, %p94
      %p97 = scmp.ne.s32.totalorder %s80, %s96
      %p98 = scmp.eq.s32.totalorder %s32, 0
      %p99 = por %p97, %p98
      %s101 = sadd.s32 %s100, 1
      %p104 = scmp.eq.s32.totalorder %s26, 1
      %p105 = scmp.ne.s32.totalorder %s100, %s102
      %p106 = scmp.eq.s32.totalorder %s26, 0
      %p107 = por %p105, %p106
      %p108 = scmp.ne.s32.totalorder %s100, %s102
      %p109 = scmp.eq.s32.totalorder %s31, 1
      %p110 = por %p108, %p109
      %p111 = scmp.ne.s32.totalorder %s102, %s103
      %p112 = scmp.eq.s32.totalorder %s31, 0
      %p113 = por %p111, %p112
      %p114 = scmp.ne.s32.totalorder %s102, %s103
      %p115 = scmp.eq.s32.totalorder %s32, 1
      %p116 = por %p114, %p115
      %p118 = scmp.ne.s32.totalorder %s103, %s117
      %p119 = scmp.eq.s32.totalorder %s32, 0
      %p120 = por %p118, %p119
      %s122 = sadd.s32 %s121, 1
      %p125 = scmp.eq.s32.totalorder %s26, 1
      %p126 = scmp.ne.s32.totalorder %s121, %s123
      %p127 = scmp.eq.s32.totalorder %s26, 0
      %p128 = por %p126, %p127
      %p129 = scmp.ne.s32.totalorder %s121, %s123
      %p130 = scmp.eq.s32.totalorder %s31, 1
      %p131 = por %p129, %p130
      %p132 = scmp.ne.s32.totalorder %s123, %s124
      %p133 = scmp.eq.s32.totalorder %s31, 0
      %p134 = por %p132, %p133
      %p135 = scmp.ne.s32.totalorder %s123, %s124
      %p136 = scmp.eq.s32.totalorder %s32, 1
      %p137 = por %p135, %p136
      %p139 = scmp.ne.s32.totalorder %s124, %s138
      %p140 = scmp.eq.s32.totalorder %s32, 0
      %p141 = por %p139, %p140
      %s143 = sadd.s32 %s142, 1
      %p146 = scmp.eq.s32.totalorder %s26, 1
      %p147 = scmp.ne.s32.totalorder %s142, %s144
      %p148 = scmp.eq.s32.totalorder %s26, 0
      %p149 = por %p147, %p148
      %p150 = scmp.ne.s32.totalorder %s142, %s144
      %p151 = scmp.eq.s32.totalorder %s31, 1
      %p152 = por %p150, %p151
      %p153 = scmp.ne.s32.totalorder %s144, %s145
      %p154 = scmp.eq.s32.totalorder %s31, 0
      %p155 = por %p153, %p154
      %p156 = scmp.ne.s32.totalorder %s144, %s145
      %p157 = scmp.eq.s32.totalorder %s32, 1
      %p158 = por %p156, %p157
      %p160 = scmp.ne.s32.totalorder %s145, %s159
      %p161 = scmp.eq.s32.totalorder %s32, 0
      %p162 = por %p160, %p161
      %s164 = sadd.s32 %s163, 1
      %p167 = scmp.eq.s32.totalorder %s26, 1
      %p168 = scmp.ne.s32.totalorder %s163, %s165
      %p169 = scmp.eq.s32.totalorder %s26, 0
      %p170 = por %p168, %p169
      %p171 = scmp.ne.s32.totalorder %s163, %s165
      %p172 = scmp.eq.s32.totalorder %s31, 1
      %p173 = por %p171, %p172
      %p174 = scmp.ne.s32.totalorder %s165, %s166
      %p175 = scmp.eq.s32.totalorder %s31, 0
      %p176 = por %p174, %p175
      %p177 = scmp.ne.s32.totalorder %s165, %s166
      %p178 = scmp.eq.s32.totalorder %s32, 1
      %p179 = por %p177, %p178
      %p181 = scmp.ne.s32.totalorder %s166, %s180
      %p182 = scmp.eq.s32.totalorder %s32, 0
      %p183 = por %p181, %p182
      %s185 = sadd.s32 %s184, 1
      %p188 = scmp.eq.s32.totalorder %s26, 1
      %p189 = scmp.ne.s32.totalorder %s184, %s186
      %p190 = scmp.eq.s32.totalorder %s26, 0
      %p191 = por %p189, %p190
      %p192 = scmp.ne.s32.totalorder %s184, %s186
      %p193 = scmp.eq.s32.totalorder %s31, 1
      %p194 = por %p192, %p193
      %p195 = scmp.ne.s32.totalorder %s186, %s187
      %p196 = scmp.eq.s32.totalorder %s31, 0
      %p197 = por %p195, %p196
      %p198 = scmp.ne.s32.totalorder %s186, %s187
      %p199 = scmp.eq.s32.totalorder %s32, 1
      %p200 = por %p198, %p199
      %p202 = scmp.ne.s32.totalorder %s187, %s201
      %p203 = scmp.eq.s32.totalorder %s32, 0
      %p204 = por %p202, %p203
      %s206 = sadd.s32 %s205, 1
      %p209 = scmp.eq.s32.totalorder %s26, 1
      %p210 = scmp.ne.s32.totalorder %s205, %s207
      %p211 = scmp.eq.s32.totalorder %s26, 0
      %p212 = por %p210, %p211
      %p213 = scmp.ne.s32.totalorder %s205, %s207
      %p214 = scmp.eq.s32.totalorder %s31, 1
      %p215 = por %p213, %p214
      %p216 = scmp.ne.s32.totalorder %s207, %s208
      %p217 = scmp.eq.s32.totalorder %s31, 0
      %p218 = por %p216, %p217
      %p219 = scmp.ne.s32.totalorder %s207, %s208
      %p220 = scmp.eq.s32.totalorder %s32, 1
      %p221 = por %p219, %p220
      %p223 = scmp.ne.s32.totalorder %s208, %s222
      %p224 = scmp.eq.s32.totalorder %s32, 0
      %p225 = por %p223, %p224
      %s227 = sadd.s32 %s226, 1
      %p230 = scmp.eq.s32.totalorder %s26, 1
      %p231 = scmp.ne.s32.totalorder %s226, %s228
      %p232 = scmp.eq.s32.totalorder %s26, 0
      %p233 = por %p231, %p232
      %p234 = scmp.ne.s32.totalorder %s226, %s228
      %p235 = scmp.eq.s32.totalorder %s31, 1
      %p236 = por %p234, %p235
      %p237 = scmp.ne.s32.totalorder %s228, %s229
      %p238 = scmp.eq.s32.totalorder %s31, 0
      %p239 = por %p237, %p238
      %p240 = scmp.ne.s32.totalorder %s228, %s229
      %p241 = scmp.eq.s32.totalorder %s32, 1
      %p242 = por %p240, %p241
      %p244 = scmp.ne.s32.totalorder %s229, %s243
      %p245 = scmp.eq.s32.totalorder %s32, 0
      %p246 = por %p244, %p245
      %s248 = sadd.s32 %s247, 1
      %p251 = scmp.eq.s32.totalorder %s26, 1
      %p252 = scmp.ne.s32.totalorder %s247, %s249
      %p253 = scmp.eq.s32.totalorder %s26, 0
      %p254 = por %p252, %p253
      %p255 = scmp.ne.s32.totalorder %s247, %s249
      %p256 = scmp.eq.s32.totalorder %s31, 1
      %p257 = por %p255, %p256
      %p258 = scmp.ne.s32.totalorder %s249, %s250
      %p259 = scmp.eq.s32.totalorder %s31, 0
      %p260 = por %p258, %p259
      %p261 = scmp.ne.s32.totalorder %s249, %s250
      %p262 = scmp.eq.s32.totalorder %s32, 1
      %p263 = por %p261, %p262
      %p265 = scmp.ne.s32.totalorder %s250, %s264
      %p266 = scmp.eq.s32.totalorder %s32, 0
      %p267 = por %p265, %p266
      %s268 = ssub.s32 %s33, %s45
      %s269 = ssub.s32 %s34, %s41
      %s270 = sor.u32 %s268, %s269
      %p271 = scmp.eq.s32.totalorder %s270, 0
      %s273 = sadd.s32 %s272, 1
      %s274 = scalar_select %p271, %s272, %s273
      %p277 = pneg %p271
      %p278 = scmp.eq.s32.totalorder %s26, 1
      %p279 = por %p277, %p278
      %p280 = scmp.ne.s32.totalorder %s272, %s275
      %p281 = scmp.eq.s32.totalorder %s26, 0
      %p282 = por %p280, %p281
      %p283 = scmp.ne.s32.totalorder %s272, %s275
      %p284 = scmp.eq.s32.totalorder %s31, 1
      %p285 = por %p283, %p284
      %p286 = scmp.ne.s32.totalorder %s275, %s276
      %p287 = scmp.eq.s32.totalorder %s31, 0
      %p288 = por %p286, %p287
      %p289 = scmp.ne.s32.totalorder %s275, %s276
      %p290 = scmp.eq.s32.totalorder %s32, 1
      %p291 = por %p289, %p290
      %p293 = scmp.ne.s32.totalorder %s276, %s292
      %p294 = scmp.eq.s32.totalorder %s32, 0
      %p295 = por %p293, %p294
      %p296 = scmp.le.s32.totalorder 1, %s26
      %p297 = scmp.lt.s32.totalorder %s26, 3
      %p298 = pnand %p296, %p297
      %p299 = pneg %p298
      // Predicated region
      $region9: #{tpu_custom_call.1} parent=5 // pred_check
        _
      $region10: #{tpu_custom_call.1} parent=5 // pred_check_branch
        %301 = sbr.rel (%p298) target = $region12
      $region11: #{tpu_custom_call.1} parent=5 // pred_region
        %s302 = ssub.s32 %s26, 1
        // Predicated region
        $region13: #{tpu_custom_call.1} parent=11 // pred_check
          %p303 = pneg %p113
        $region14: #{tpu_custom_call.1} parent=11 // pred_check_branch
          %305 = sbr.rel (%p303) target = $region16
        $region15: #{tpu_custom_call.1} parent=11 // pred_region
          %s307 = ssub.s32 256, 256
          %308 = vsyncadd [#allocation8], %s307
          %s309 = sshll.u32 [#allocation9], 4
          %s310 = int_to_ptr.vmem [resolvable:$true] %s309
          %315 = dma.hbm_to_vmem [thread:$0]  %s2, 256, %s310, [#allocation8], 64, 64, 4
        $region16: #{tpu_custom_call.1} parent=11 // pred_fallthru
          _
        // Predicated region
        $region17: #{tpu_custom_call.1} parent=11 // pred_check
          %p316 = pneg %p134
        $region18: #{tpu_custom_call.1} parent=11 // pred_check_branch
          %318 = sbr.rel (%p316) target = $region20
        $region19: #{tpu_custom_call.1} parent=11 // pred_region
          _
        $region20: #{tpu_custom_call.1} parent=11 // pred_fallthru
          _
        // Predicated region
        $region21: #{tpu_custom_call.1} parent=11 // pred_check
          %p319 = pneg %p155
        $region22: #{tpu_custom_call.1} parent=11 // pred_check_branch
          %321 = sbr.rel (%p319) target = $region24
        $region23: #{tpu_custom_call.1} parent=11 // pred_region
          %s323 = ssub.s32 256, 256
          %324 = vsyncadd [#allocation11], %s323
          %s325 = sshll.u32 [#allocation10], 4
          %s326 = int_to_ptr.vmem [resolvable:$true] %s325
          %331 = dma.hbm_to_vmem [thread:$0]  %s4, 256, %s326, [#allocation11], 64, 64, 4
        $region24: #{tpu_custom_call.1} parent=11 // pred_fallthru
          _
        // Predicated region
        $region25: #{tpu_custom_call.1} parent=11 // pred_check
          %p332 = pneg %p176
        $region26: #{tpu_custom_call.1} parent=11 // pred_check_branch
          %334 = sbr.rel (%p332) target = $region28
        $region27: #{tpu_custom_call.1} parent=11 // pred_region
          _
        $region28: #{tpu_custom_call.1} parent=11 // pred_fallthru
          _
        // Predicated region
        $region29: #{tpu_custom_call.1} parent=11 // pred_check
          %p335 = pneg %p197
        $region30: #{tpu_custom_call.1} parent=11 // pred_check_branch
          %337 = sbr.rel (%p335) target = $region32
        $region31: #{tpu_custom_call.1} parent=11 // pred_region
          _
        $region32: #{tpu_custom_call.1} parent=11 // pred_fallthru
          _
        // Predicated region
        $region33: #{tpu_custom_call.1} parent=11 // pred_check
          %p338 = pneg %p218
        $region34: #{tpu_custom_call.1} parent=11 // pred_check_branch
          %340 = sbr.rel (%p338) target = $region36
        $region35: #{tpu_custom_call.1} parent=11 // pred_region
          _
        $region36: #{tpu_custom_call.1} parent=11 // pred_fallthru
          _
        // Predicated region
        $region37: #{tpu_custom_call.1} parent=11 // pred_check
          %p341 = pneg %p239
        $region38: #{tpu_custom_call.1} parent=11 // pred_check_branch
          %343 = sbr.rel (%p341) target = $region40
        $region39: #{tpu_custom_call.1} parent=11 // pred_region
          %s345 = ssub.s32 256, 256
          %346 = vsyncadd [#allocation11], %s345
          %s347 = sshll.u32 [#allocation12], 4
          %s348 = int_to_ptr.vmem [resolvable:$true] %s347
          %353 = dma.hbm_to_vmem [thread:$0]  %s8, 256, %s348, [#allocation11], 64, 64, 4
        $region40: #{tpu_custom_call.1} parent=11 // pred_fallthru
          _
        // Predicated region
        $region41: #{tpu_custom_call.1} parent=11 // pred_check
          %p354 = pneg %p260
        $region42: #{tpu_custom_call.1} parent=11 // pred_check_branch
          %356 = sbr.rel (%p354) target = $region44
        $region43: #{tpu_custom_call.1} parent=11 // pred_region
          _
        $region44: #{tpu_custom_call.1} parent=11 // pred_fallthru
          _
      $region12: #{tpu_custom_call.1} parent=5 // pred_fallthru
        _
      %p357 = scmp.lt.s32.totalorder %s26, 2
      // Predicated region
      $region45: #{tpu_custom_call.1} parent=5 // pred_check
        %p358 = pneg %p357
      $region46: #{tpu_custom_call.1} parent=5 // pred_check_branch
        %360 = sbr.rel (%p358) target = $region48
      $region47: #{tpu_custom_call.1} parent=5 // pred_region
        // Predicated region
        $region49: #{tpu_custom_call.1} parent=47 // pred_check
          %p361 = pneg %p58
        $region50: #{tpu_custom_call.1} parent=47 // pred_check_branch
          %363 = sbr.rel (%p361) target = $region52
        $region51: #{tpu_custom_call.1} parent=47 // pred_region
          %s364 = sand.u32 %s48, 1
          %s365 = scalar_lea.sflag [#allocation5], %s364
          %s366 = sand.u32 %s48, 1
          %s367 = smul.addr %s366, 4
          %s368 = scalar_lea.vmem [#allocation4], %s367
          %s370 = ssub.s32 64, 64
          %371 = vsyncadd %s365, %s370
          %s372 = smul.addr %s33, 64
          %s373 = scalar_lea.hbm %s0, %s372
          %s375 = sshll.u32 %s368, 4
          %s376 = int_to_ptr.vmem [resolvable:$true] %s375
          %378 = dma.hbm_to_vmem [thread:$0]  %s373, 64, %s376, %s365
        $region52: #{tpu_custom_call.1} parent=47 // pred_fallthru
          _
        // Predicated region
        $region53: #{tpu_custom_call.1} parent=47 // pred_check
          %p379 = pneg %p86
        $region54: #{tpu_custom_call.1} parent=47 // pred_check_branch
          %381 = sbr.rel (%p379) target = $region56
        $region55: #{tpu_custom_call.1} parent=47 // pred_region
          %s382 = sand.u32 %s26, 1
          %s383 = scalar_lea.sflag [#allocation8], %s382
          %s384 = sand.u32 %s76, 1
          %s385 = smul.addr %s384, 4
          %s386 = scalar_lea.vmem [#allocation7], %s385
          %s388 = ssub.s32 64, 64
          %389 = vsyncadd %s383, %s388
          %s390 = sadd.s32 %s34, %s33
          %s391 = smul.addr %s390, 64
          %s392 = scalar_lea.hbm %s1, %s391
          %s394 = sshll.u32 %s386, 4
          %s395 = int_to_ptr.vmem [resolvable:$true] %s394
          %397 = dma.hbm_to_vmem [thread:$0]  %s392, 64, %s395, %s383
        $region56: #{tpu_custom_call.1} parent=47 // pred_fallthru
          _
      $region48: #{tpu_custom_call.1} parent=5 // pred_fallthru
        _
      %p398 = scmp.le.s32.totalorder 1, %s26
      %p399 = scmp.lt.s32.totalorder %s26, 3
      %p400 = pnand %p398, %p399
      %p401 = pneg %p400
      // Predicated region
      $region57: #{tpu_custom_call.1} parent=5 // pred_check
        _
      $region58: #{tpu_custom_call.1} parent=5 // pred_check_branch
        %403 = sbr.rel (%p400) target = $region60
      $region59: #{tpu_custom_call.1} parent=5 // pred_region
        %s404 = ssub.s32 %s26, 1
        %s405 = sand.u32 %s51, 1
        %s406 = scalar_lea.sflag [#allocation5], %s405
        %s407 = sand.u32 %s51, 1
        %s408 = smul.addr %s407, 4
        %s409 = scalar_lea.vmem [#allocation4], %s408
        // Predicated region
        $region61: #{tpu_custom_call.1} parent=59 // pred_check
          %p410 = pneg %p64
        $region62: #{tpu_custom_call.1} parent=59 // pred_check_branch
          %412 = sbr.rel (%p410) target = $region64
        $region63: #{tpu_custom_call.1} parent=59 // pred_region
          %413 = dma.done %s406, 64
        $region64: #{tpu_custom_call.1} parent=59 // pred_fallthru
          _
        %s414 = sand.u32 %s31, 1
        %s415 = scalar_lea.sflag [#allocation8], %s414
        %s416 = sand.u32 %s79, 1
        %s417 = smul.addr %s416, 4
        %s418 = scalar_lea.vmem [#allocation7], %s417
        // Predicated region
        $region65: #{tpu_custom_call.1} parent=59 // pred_check
          %p419 = pneg %p92
        $region66: #{tpu_custom_call.1} parent=59 // pred_check_branch
          %421 = sbr.rel (%p419) target = $region68
        $region67: #{tpu_custom_call.1} parent=59 // pred_region
          %422 = dma.done %s415, 64
        $region68: #{tpu_custom_call.1} parent=59 // pred_fallthru
          _
        // Predicated region
        $region69: #{tpu_custom_call.1} parent=59 // pred_check
          %p423 = pneg %p113
        $region70: #{tpu_custom_call.1} parent=59 // pred_check_branch
          %425 = sbr.rel (%p423) target = $region72
        $region71: #{tpu_custom_call.1} parent=59 // pred_region
          %426 = dma.done [#allocation8], 256
        $region72: #{tpu_custom_call.1} parent=59 // pred_fallthru
          _
        // Predicated region
        $region73: #{tpu_custom_call.1} parent=59 // pred_check
          %p427 = pneg %p155
        $region74: #{tpu_custom_call.1} parent=59 // pred_check_branch
          %429 = sbr.rel (%p427) target = $region76
        $region75: #{tpu_custom_call.1} parent=59 // pred_region
          %430 = dma.done [#allocation11], 256
        $region76: #{tpu_custom_call.1} parent=59 // pred_fallthru
          _
        // Predicated region
        $region77: #{tpu_custom_call.1} parent=59 // pred_check
          %p431 = pneg %p239
        $region78: #{tpu_custom_call.1} parent=59 // pred_check_branch
          %433 = sbr.rel (%p431) target = $region80
        $region79: #{tpu_custom_call.1} parent=59 // pred_region
          %434 = dma.done [#allocation11], 256
        $region80: #{tpu_custom_call.1} parent=59 // pred_fallthru
          _
        %s435 = sand.u32 %s51, 1
        %s436 = scalar_lea.sflag [#allocation5], %s435
        %s437 = sand.u32 %s51, 1
        %s438 = smul.addr %s437, 4
        %s439 = scalar_lea.vmem [#allocation4], %s438
        %p440 = pneg %p64
        %p441 = pneg %p61
        %s442 = sand.u32 %s31, 1
        %s443 = scalar_lea.sflag [#allocation8], %s442
        %s444 = sand.u32 %s79, 1
        %s445 = smul.addr %s444, 4
        %s446 = scalar_lea.vmem [#allocation7], %s445
        %p447 = pneg %p92
        %p448 = pneg %p89
        %p449 = pneg %p113
        %p450 = pneg %p110
        %p451 = pneg %p134
        %p452 = pneg %p131
        %p453 = pneg %p155
        %p454 = pneg %p152
        %p455 = pneg %p176
        %p456 = pneg %p173
        %p457 = pneg %p197
        %p458 = pneg %p194
        %p459 = pneg %p218
        %p460 = pneg %p215
        %p461 = pneg %p239
        %p462 = pneg %p236
        %p463 = pneg %p260
        %p464 = pneg %p257
        %p465 = pneg %p288
        %p466 = pneg %p285
        %s467 = sand.u32 %s275, 1
        %s468 = scalar_lea.sflag [#allocation6], %s467
        %s469 = sand.u32 %s275, 1
        %s470 = smul.addr %s469, 8
        %s471 = scalar_lea.vmem [#allocation13], %s470
        %p473 = scmp.eq.s32.totalorder %s36, 0
        // Predicated region
        $region81: #{tpu_custom_call.1} parent=59 // pred_check
          %p474 = pneg %p473
        $region82: #{tpu_custom_call.1} parent=59 // pred_check_branch
          %476 = sbr.rel (%p474) target = $region84
        $region83: #{tpu_custom_call.1} parent=59 // pred_region
          %v477 = vld [vmem:[%s409] sm:$0xf]
          %v478 = vld [vmem:[#allocation10] sm:$0xf]
          %v479 = vld [vmem:[#allocation10 + $0x4] sm:$0xf]
          %v480 = vld [vmem:[#allocation10 + $0x8] sm:$0xf]
          %v481 = vld [vmem:[#allocation10 + $0xc] sm:$0xf]
          %v482 = vld [vmem:[%s5] sm:$0x1]
          %v484 = vlaneseq
          %v485 = vshrl.u32 %v484, 7
          %v486 = vsub.s32 0, %v485
          %v487 = vrot.slane %v482, %v486
          %v493 = vunpack.c.l.b16 %v478
          %v494 = vunpack.c.l.b16 %v479
          %v495 = vunpack.c.l.b16 %v480
          %v496 = vunpack.c.l.b16 %v481
          %v497 = vpack.c.b16 %v494, %v493
          %v498 = vpack.c.b16 %v496, %v495
          %vm501 = vcmask 261120
          %v503 = vsel %vm501, %v477, 0
          %505 = vmatprep.subr.bf16.mxu0 0
          %506 = vmatpush1.bf16.msra.mxu0 %v497
          %507 = vmatprep.subr.bf16.mxu0 0
          %508 = vmatpush1.bf16.msra.mxu0 %v498
          %509 = vmatprep.subr.bf16.mxu0 0
          %510 = vmatpush1.bf16.msra.mxu0 0
          %511 = vmatprep.subr.bf16.mxu0 0
          %512 = vmatpush1.bf16.msra.mxu0 0
          %513 = vmatprep.subr.bf16.mxu0 0
          %514 = vmatpush1.bf16.msra.mxu0 0
          %515 = vmatprep.subr.bf16.mxu0 0
          %516 = vmatpush1.bf16.msra.mxu0 0
          %517 = vmatprep.subr.bf16.mxu0 0
          %518 = vmatpush1.bf16.msra.mxu0 0
          %519 = vmatprep.subr.bf16.mxu0 0
          %520 = vmatpush1.bf16.msra.mxu0 0
          %521 = vmatprep.subr.bf16.mxu0 0
          %522 = vmatpush1.bf16.msra.mxu0 0
          %523 = vmatprep.subr.bf16.mxu0 0
          %524 = vmatpush1.bf16.msra.mxu0 0
          %525 = vmatprep.subr.bf16.mxu0 0
          %526 = vmatpush1.bf16.msra.mxu0 0
          %527 = vmatprep.subr.bf16.mxu0 0
          %528 = vmatpush1.bf16.msra.mxu0 0
          %529 = vmatprep.subr.bf16.mxu0 0
          %530 = vmatpush1.bf16.msra.mxu0 0
          %531 = vmatprep.subr.bf16.mxu0 0
          %532 = vmatpush1.bf16.msra.mxu0 0
          %533 = vmatprep.subr.bf16.mxu0 0
          %534 = vmatpush1.bf16.msra.mxu0 0
          %535 = vmatprep.subr.bf16.mxu0 0
          %536 = vmatpush1.bf16.msra.mxu0 0
          %537 = vmatprep.mubr.bf16.mxu0 0
          %538 = vmatmul.mubr.bf16.gmra.mrb[0].mxu0 %v503
          %v539 = vpop.f32.mrb[0].mxu0
          %v540 = vadd.f32 %v487, %v539
          %v541 = vpop.f32.mrb[0].mxu0
          %v542 = vpop.f32.mrb[0].mxu0
          %v543 = vpop.f32.mrb[0].mxu0
          %544 = vdwg.mxu0
          %v545 = vld [vmem:[%s6] sm:$0xf]
          %v546 = vld [vmem:[%s6 + $0x4] sm:$0xf]
          %v547 = vld [vmem:[%s6 + $0x8] sm:$0xf]
          %v548 = vld [vmem:[%s6 + $0xc] sm:$0xf]
          %v549 = vld [vmem:[%s7] sm:$0x1]
          %v551 = vlaneseq
          %v552 = vshrl.u32 %v551, 7
          %v553 = vsub.s32 0, %v552
          %v554 = vrot.slane %v549, %v553
          %v560 = vunpack.c.l.b16 %v545
          %v561 = vunpack.c.l.b16 %v546
          %v562 = vunpack.c.l.b16 %v547
          %v563 = vunpack.c.l.b16 %v548
          %v564 = vpack.c.b16 %v561, %v560
          %v565 = vpack.c.b16 %v563, %v562
          %568 = vmatprep.subr.bf16.mxu0 0
          %569 = vmatpush1.bf16.msra.mxu0 %v564
          %570 = vmatprep.subr.bf16.mxu0 0
          %571 = vmatpush1.bf16.msra.mxu0 %v565
          %572 = vmatprep.subr.bf16.mxu0 0
          %573 = vmatpush1.bf16.msra.mxu0 0
          %574 = vmatprep.subr.bf16.mxu0 0
          %575 = vmatpush1.bf16.msra.mxu0 0
          %576 = vmatprep.subr.bf16.mxu0 0
          %577 = vmatpush1.bf16.msra.mxu0 0
          %578 = vmatprep.subr.bf16.mxu0 0
          %579 = vmatpush1.bf16.msra.mxu0 0
          %580 = vmatprep.subr.bf16.mxu0 0
          %581 = vmatpush1.bf16.msra.mxu0 0
          %582 = vmatprep.subr.bf16.mxu0 0
          %583 = vmatpush1.bf16.msra.mxu0 0
          %584 = vmatprep.subr.bf16.mxu0 0
          %585 = vmatpush1.bf16.msra.mxu0 0
          %586 = vmatprep.subr.bf16.mxu0 0
          %587 = vmatpush1.bf16.msra.mxu0 0
          %588 = vmatprep.subr.bf16.mxu0 0
          %589 = vmatpush1.bf16.msra.mxu0 0
          %590 = vmatprep.subr.bf16.mxu0 0
          %591 = vmatpush1.bf16.msra.mxu0 0
          %592 = vmatprep.subr.bf16.mxu0 0
          %593 = vmatpush1.bf16.msra.mxu0 0
          %594 = vmatprep.subr.bf16.mxu0 0
          %595 = vmatpush1.bf16.msra.mxu0 0
          %596 = vmatprep.subr.bf16.mxu0 0
          %597 = vmatpush1.bf16.msra.mxu0 0
          %598 = vmatprep.subr.bf16.mxu0 0
          %599 = vmatpush1.bf16.msra.mxu0 0
          %600 = vmatprep.mubr.bf16.mxu0 0
          %601 = vmatmul.mubr.bf16.gmra.mrb[0].mxu0 %v503
          %v602 = vpop.f32.mrb[0].mxu0
          %v603 = vadd.f32 %v554, %v602
          %v604 = vpop.f32.mrb[0].mxu0
          %v605 = vpop.f32.mrb[0].mxu0
          %v606 = vpop.f32.mrb[0].mxu0
          %607 = vdwg.mxu0
          %609 = vrot.lane.b32.xlu0 %v540, 120
          %v610 = vpop.permute.xlu0 %609
          %612 = vrot.lane.b32.xlu0 %v540, 112
          %v613 = vpop.permute.xlu0 %612
          %615 = vrot.lane.b32.xlu0 %v540, 104
          %v616 = vpop.permute.xlu0 %615
          %v618 = vcombine.low %v540, %v613
          %v619 = vcombine.high %v540, %v613
          %v621 = vunpack.c.l.s4 1983009808
          %v622 = vunpack.c.0.s8 %v621
          %v623 = vlaneseq
          %v624 = vshrl.u32 %v623, 7
          %v625 = vsub.s32 %v622, %v624
          %v626 = vrot.slane %v618, %v625
          %v628 = vunpack.c.l.s4 1983009808
          %v629 = vunpack.c.0.s8 %v628
          %v630 = vlaneseq
          %v631 = vshrl.u32 %v630, 7
          %v632 = vsub.s32 %v629, %v631
          %v633 = vrot.slane %v619, %v632
          %v634 = vcombine.low %v610, %v616
          %v635 = vcombine.high %v610, %v616
          %v637 = vunpack.c.l.s4 1983009808
          %v638 = vunpack.c.0.s8 %v637
          %v639 = vlaneseq
          %v640 = vshrl.u32 %v639, 7
          %v641 = vsub.s32 %v638, %v640
          %v642 = vrot.slane %v634, %v641
          %v644 = vunpack.c.l.s4 1983009808
          %v645 = vunpack.c.0.s8 %v644
          %v646 = vlaneseq
          %v647 = vshrl.u32 %v646, 7
          %v648 = vsub.s32 %v645, %v647
          %v649 = vrot.slane %v635, %v648
          %v650 = vcombine.low %v626, %v642
          %v651 = vcombine.high %v626, %v642
          %v653 = vunpack.c.l.s4 1934713408
          %v654 = vunpack.c.0.s8 %v653
          %v655 = vlaneseq
          %v656 = vshrl.u32 %v655, 7
          %v657 = vsub.s32 %v654, %v656
          %v658 = vrot.slane %v650, %v657
          %v660 = vunpack.c.l.s4 1934713408
          %v661 = vunpack.c.0.s8 %v660
          %v662 = vlaneseq
          %v663 = vshrl.u32 %v662, 7
          %v664 = vsub.s32 %v661, %v663
          %v665 = vrot.slane %v651, %v664
          %v666 = vcombine.low %v633, %v649
          %v667 = vcombine.high %v633, %v649
          %v669 = vunpack.c.l.s4 1934713408
          %v670 = vunpack.c.0.s8 %v669
          %v671 = vlaneseq
          %v672 = vshrl.u32 %v671, 7
          %v673 = vsub.s32 %v670, %v672
          %v674 = vrot.slane %v666, %v673
          %v676 = vunpack.c.l.s4 1934713408
          %v677 = vunpack.c.0.s8 %v676
          %v678 = vlaneseq
          %v679 = vshrl.u32 %v678, 7
          %v680 = vsub.s32 %v677, %v679
          %v681 = vrot.slane %v667, %v680
          %v682 = vcombine.high %v658, 0.0
          %v683 = vcombine.high %v665, 0.0
          %v684 = vcombine.high %v674, 0.0
          %v685 = vcombine.high %v681, 0.0
          %v686 = vcombine.low %v658, %v665
          %v688 = vunpack.c.l.s4 1983009808
          %v689 = vunpack.c.0.s8 %v688
          %v690 = vlaneseq
          %v691 = vshrl.u32 %v690, 7
          %v692 = vsub.s32 %v689, %v691
          %v693 = vrot.slane %v686, %v692
          %v694 = vcombine.low %v682, %v683
          %v696 = vunpack.c.l.s4 1983009808
          %v697 = vunpack.c.0.s8 %v696
          %v698 = vlaneseq
          %v699 = vshrl.u32 %v698, 7
          %v700 = vsub.s32 %v697, %v699
          %v701 = vrot.slane %v694, %v700
          %v702 = vcombine.low %v674, %v681
          %v704 = vunpack.c.l.s4 1983009808
          %v705 = vunpack.c.0.s8 %v704
          %v706 = vlaneseq
          %v707 = vshrl.u32 %v706, 7
          %v708 = vsub.s32 %v705, %v707
          %v709 = vrot.slane %v702, %v708
          %v710 = vcombine.low %v684, %v685
          %v712 = vunpack.c.l.s4 1983009808
          %v713 = vunpack.c.0.s8 %v712
          %v714 = vlaneseq
          %v715 = vshrl.u32 %v714, 7
          %v716 = vsub.s32 %v713, %v715
          %v717 = vrot.slane %v710, %v716
          %v718 = vcombine.low %v693, %v701
          %v719 = vcombine.high %v693, %v701
          %v721 = vunpack.c.l.s4 1934713408
          %v722 = vunpack.c.0.s8 %v721
          %v723 = vlaneseq
          %v724 = vshrl.u32 %v723, 7
          %v725 = vsub.s32 %v722, %v724
          %v726 = vrot.slane %v718, %v725
          %v728 = vunpack.c.l.s4 1934713408
          %v729 = vunpack.c.0.s8 %v728
          %v730 = vlaneseq
          %v731 = vshrl.u32 %v730, 7
          %v732 = vsub.s32 %v729, %v731
          %v733 = vrot.slane %v719, %v732
          %v734 = vcombine.low %v709, %v717
          %v735 = vcombine.high %v709, %v717
          %v737 = vunpack.c.l.s4 1934713408
          %v738 = vunpack.c.0.s8 %v737
          %v739 = vlaneseq
          %v740 = vshrl.u32 %v739, 7
          %v741 = vsub.s32 %v738, %v740
          %v742 = vrot.slane %v734, %v741
          %v744 = vunpack.c.l.s4 1934713408
          %v745 = vunpack.c.0.s8 %v744
          %v746 = vlaneseq
          %v747 = vshrl.u32 %v746, 7
          %v748 = vsub.s32 %v745, %v747
          %v749 = vrot.slane %v735, %v748
          %v750 = vcombine.low %v726, %v742
          %v751 = vcombine.high %v726, %v742
          %v752 = vcombine.low %v733, %v749
          %v753 = vcombine.high %v733, %v749
          %v754 = vpack.c.bf16 %v750, %v750
          %v755 = vpack.c.bf16 %v751, %v751
          %v756 = vpack.c.bf16 %v752, %v752
          %v757 = vpack.c.bf16 %v753, %v753
          %vm758 = vcmask 60416
          %759 = vst.msk [vmem:[#allocation2] sm:$0xf] %vm758, %v754
          %760 = vst.msk [vmem:[#allocation2 + $0x4] sm:$0xf] %vm758, %v755
          %761 = vst.msk [vmem:[#allocation2 + $0x8] sm:$0xf] %vm758, %v756
          %762 = vst.msk [vmem:[#allocation2 + $0xc] sm:$0xf] %vm758, %v757
          %764 = vrot.lane.b32.xlu0 %v603, 120
          %v765 = vpop.permute.xlu0 %764
          %767 = vrot.lane.b32.xlu0 %v603, 112
          %v768 = vpop.permute.xlu0 %767
          %770 = vrot.lane.b32.xlu0 %v603, 104
          %v771 = vpop.permute.xlu0 %770
          %v773 = vcombine.low %v603, %v768
          %v774 = vcombine.high %v603, %v768
          %v776 = vunpack.c.l.s4 1983009808
          %v777 = vunpack.c.0.s8 %v776
          %v778 = vlaneseq
          %v779 = vshrl.u32 %v778, 7
          %v780 = vsub.s32 %v777, %v779
          %v781 = vrot.slane %v773, %v780
          %v783 = vunpack.c.l.s4 1983009808
          %v784 = vunpack.c.0.s8 %v783
          %v785 = vlaneseq
          %v786 = vshrl.u32 %v785, 7
          %v787 = vsub.s32 %v784, %v786
          %v788 = vrot.slane %v774, %v787
          %v789 = vcombine.low %v765, %v771
          %v790 = vcombine.high %v765, %v771
          %v792 = vunpack.c.l.s4 1983009808
          %v793 = vunpack.c.0.s8 %v792
          %v794 = vlaneseq
          %v795 = vshrl.u32 %v794, 7
          %v796 = vsub.s32 %v793, %v795
          %v797 = vrot.slane %v789, %v796
          %v799 = vunpack.c.l.s4 1983009808
          %v800 = vunpack.c.0.s8 %v799
          %v801 = vlaneseq
          %v802 = vshrl.u32 %v801, 7
          %v803 = vsub.s32 %v800, %v802
          %v804 = vrot.slane %v790, %v803
          %v805 = vcombine.low %v781, %v797
          %v806 = vcombine.high %v781, %v797
          %v808 = vunpack.c.l.s4 1934713408
          %v809 = vunpack.c.0.s8 %v808
          %v810 = vlaneseq
          %v811 = vshrl.u32 %v810, 7
          %v812 = vsub.s32 %v809, %v811
          %v813 = vrot.slane %v805, %v812
          %v815 = vunpack.c.l.s4 1934713408
          %v816 = vunpack.c.0.s8 %v815
          %v817 = vlaneseq
          %v818 = vshrl.u32 %v817, 7
          %v819 = vsub.s32 %v816, %v818
          %v820 = vrot.slane %v806, %v819
          %v821 = vcombine.low %v788, %v804
          %v822 = vcombine.high %v788, %v804
          %v824 = vunpack.c.l.s4 1934713408
          %v825 = vunpack.c.0.s8 %v824
          %v826 = vlaneseq
          %v827 = vshrl.u32 %v826, 7
          %v828 = vsub.s32 %v825, %v827
          %v829 = vrot.slane %v821, %v828
          %v831 = vunpack.c.l.s4 1934713408
          %v832 = vunpack.c.0.s8 %v831
          %v833 = vlaneseq
          %v834 = vshrl.u32 %v833, 7
          %v835 = vsub.s32 %v832, %v834
          %v836 = vrot.slane %v822, %v835
          %v837 = vcombine.high %v813, 0.0
          %v838 = vcombine.high %v820, 0.0
          %v839 = vcombine.high %v829, 0.0
          %v840 = vcombine.high %v836, 0.0
          %v841 = vcombine.low %v813, %v820
          %v843 = vunpack.c.l.s4 1983009808
          %v844 = vunpack.c.0.s8 %v843
          %v845 = vlaneseq
          %v846 = vshrl.u32 %v845, 7
          %v847 = vsub.s32 %v844, %v846
          %v848 = vrot.slane %v841, %v847
          %v849 = vcombine.low %v837, %v838
          %v851 = vunpack.c.l.s4 1983009808
          %v852 = vunpack.c.0.s8 %v851
          %v853 = vlaneseq
          %v854 = vshrl.u32 %v853, 7
          %v855 = vsub.s32 %v852, %v854
          %v856 = vrot.slane %v849, %v855
          %v857 = vcombine.low %v829, %v836
          %v859 = vunpack.c.l.s4 1983009808
          %v860 = vunpack.c.0.s8 %v859
          %v861 = vlaneseq
          %v862 = vshrl.u32 %v861, 7
          %v863 = vsub.s32 %v860, %v862
          %v864 = vrot.slane %v857, %v863
          %v865 = vcombine.low %v839, %v840
          %v867 = vunpack.c.l.s4 1983009808
          %v868 = vunpack.c.0.s8 %v867
          %v869 = vlaneseq
          %v870 = vshrl.u32 %v869, 7
          %v871 = vsub.s32 %v868, %v870
          %v872 = vrot.slane %v865, %v871
          %v873 = vcombine.low %v848, %v856
          %v874 = vcombine.high %v848, %v856
          %v876 = vunpack.c.l.s4 1934713408
          %v877 = vunpack.c.0.s8 %v876
          %v878 = vlaneseq
          %v879 = vshrl.u32 %v878, 7
          %v880 = vsub.s32 %v877, %v879
          %v881 = vrot.slane %v873, %v880
          %v883 = vunpack.c.l.s4 1934713408
          %v884 = vunpack.c.0.s8 %v883
          %v885 = vlaneseq
          %v886 = vshrl.u32 %v885, 7
          %v887 = vsub.s32 %v884, %v886
          %v888 = vrot.slane %v874, %v887
          %v889 = vcombine.low %v864, %v872
          %v890 = vcombine.high %v864, %v872
          %v892 = vunpack.c.l.s4 1934713408
          %v893 = vunpack.c.0.s8 %v892
          %v894 = vlaneseq
          %v895 = vshrl.u32 %v894, 7
          %v896 = vsub.s32 %v893, %v895
          %v897 = vrot.slane %v889, %v896
          %v899 = vunpack.c.l.s4 1934713408
          %v900 = vunpack.c.0.s8 %v899
          %v901 = vlaneseq
          %v902 = vshrl.u32 %v901, 7
          %v903 = vsub.s32 %v900, %v902
          %v904 = vrot.slane %v890, %v903
          %v905 = vcombine.low %v881, %v897
          %v906 = vcombine.high %v881, %v897
          %v907 = vcombine.low %v888, %v904
          %v908 = vcombine.high %v888, %v904
          %v909 = vpack.c.bf16 %v905, %v905
          %v910 = vpack.c.bf16 %v906, %v906
          %v911 = vpack.c.bf16 %v907, %v907
          %v912 = vpack.c.bf16 %v908, %v908
          %913 = vst.msk [vmem:[#allocation3] sm:$0xf] %vm758, %v909
          %914 = vst.msk [vmem:[#allocation3 + $0x4] sm:$0xf] %vm758, %v910
          %915 = vst.msk [vmem:[#allocation3 + $0x8] sm:$0xf] %vm758, %v911
          %916 = vst.msk [vmem:[#allocation3 + $0xc] sm:$0xf] %vm758, %v912
        $region84: #{tpu_custom_call.1} parent=59 // pred_fallthru
          _
        %v917 = vld [vmem:[%s418] sm:$0xf]
        %v918 = vld [vmem:[#allocation9] sm:$0xf]
        %v919 = vld [vmem:[#allocation9 + $0x4] sm:$0xf]
        %v920 = vld [vmem:[#allocation9 + $0x8] sm:$0xf]
        %v921 = vld [vmem:[#allocation9 + $0xc] sm:$0xf]
        %v922 = vld [vmem:[%s3] sm:$0x1]
        %v924 = vlaneseq
        %v925 = vshrl.u32 %v924, 7
        %v926 = vsub.s32 0, %v925
        %v927 = vrot.slane %v922, %v926
        %v933 = vunpack.c.l.b16 %v918
        %v934 = vunpack.c.l.b16 %v919
        %v935 = vunpack.c.l.b16 %v920
        %v936 = vunpack.c.l.b16 %v921
        %v937 = vpack.c.b16 %v934, %v933
        %v938 = vpack.c.b16 %v936, %v935
        %vm941 = vcmask 261120
        %v943 = vsel %vm941, %v917, 0
        %945 = vmatprep.subr.bf16.mxu0 0
        %946 = vmatpush1.bf16.msra.mxu0 %v937
        %947 = vmatprep.subr.bf16.mxu0 0
        %948 = vmatpush1.bf16.msra.mxu0 %v938
        %949 = vmatprep.subr.bf16.mxu0 0
        %950 = vmatpush1.bf16.msra.mxu0 0
        %951 = vmatprep.subr.bf16.mxu0 0
        %952 = vmatpush1.bf16.msra.mxu0 0
        %953 = vmatprep.subr.bf16.mxu0 0
        %954 = vmatpush1.bf16.msra.mxu0 0
        %955 = vmatprep.subr.bf16.mxu0 0
        %956 = vmatpush1.bf16.msra.mxu0 0
        %957 = vmatprep.subr.bf16.mxu0 0
        %958 = vmatpush1.bf16.msra.mxu0 0
        %959 = vmatprep.subr.bf16.mxu0 0
        %960 = vmatpush1.bf16.msra.mxu0 0
        %961 = vmatprep.subr.bf16.mxu0 0
        %962 = vmatpush1.bf16.msra.mxu0 0
        %963 = vmatprep.subr.bf16.mxu0 0
        %964 = vmatpush1.bf16.msra.mxu0 0
        %965 = vmatprep.subr.bf16.mxu0 0
        %966 = vmatpush1.bf16.msra.mxu0 0
        %967 = vmatprep.subr.bf16.mxu0 0
        %968 = vmatpush1.bf16.msra.mxu0 0
        %969 = vmatprep.subr.bf16.mxu0 0
        %970 = vmatpush1.bf16.msra.mxu0 0
        %971 = vmatprep.subr.bf16.mxu0 0
        %972 = vmatpush1.bf16.msra.mxu0 0
        %973 = vmatprep.subr.bf16.mxu0 0
        %974 = vmatpush1.bf16.msra.mxu0 0
        %975 = vmatprep.subr.bf16.mxu0 0
        %976 = vmatpush1.bf16.msra.mxu0 0
        %977 = vmatprep.mubr.bf16.mxu0 0
        %978 = vmatmul.mubr.bf16.gmra.mrb[0].mxu0 %v943
        %v979 = vpop.f32.mrb[0].mxu0
        %v980 = vadd.f32 %v927, %v979
        %v981 = vpop.f32.mrb[0].mxu0
        %v982 = vpop.f32.mrb[0].mxu0
        %v983 = vpop.f32.mrb[0].mxu0
        %984 = vdwg.mxu0
        %986 = vrot.lane.b32.xlu0 %v980, 120
        %v987 = vpop.permute.xlu0 %986
        %989 = vrot.lane.b32.xlu0 %v980, 112
        %v990 = vpop.permute.xlu0 %989
        %992 = vrot.lane.b32.xlu0 %v980, 104
        %v993 = vpop.permute.xlu0 %992
        %v995 = vcombine.low %v980, %v990
        %v996 = vcombine.high %v980, %v990
        %v998 = vunpack.c.l.s4 1983009808
        %v999 = vunpack.c.0.s8 %v998
        %v1000 = vlaneseq
        %v1001 = vshrl.u32 %v1000, 7
        %v1002 = vsub.s32 %v999, %v1001
        %v1003 = vrot.slane %v995, %v1002
        %v1005 = vunpack.c.l.s4 1983009808
        %v1006 = vunpack.c.0.s8 %v1005
        %v1007 = vlaneseq
        %v1008 = vshrl.u32 %v1007, 7
        %v1009 = vsub.s32 %v1006, %v1008
        %v1010 = vrot.slane %v996, %v1009
        %v1011 = vcombine.low %v987, %v993
        %v1012 = vcombine.high %v987, %v993
        %v1014 = vunpack.c.l.s4 1983009808
        %v1015 = vunpack.c.0.s8 %v1014
        %v1016 = vlaneseq
        %v1017 = vshrl.u32 %v1016, 7
        %v1018 = vsub.s32 %v1015, %v1017
        %v1019 = vrot.slane %v1011, %v1018
        %v1021 = vunpack.c.l.s4 1983009808
        %v1022 = vunpack.c.0.s8 %v1021
        %v1023 = vlaneseq
        %v1024 = vshrl.u32 %v1023, 7
        %v1025 = vsub.s32 %v1022, %v1024
        %v1026 = vrot.slane %v1012, %v1025
        %v1027 = vcombine.low %v1003, %v1019
        %v1028 = vcombine.high %v1003, %v1019
        %v1030 = vunpack.c.l.s4 1934713408
        %v1031 = vunpack.c.0.s8 %v1030
        %v1032 = vlaneseq
        %v1033 = vshrl.u32 %v1032, 7
        %v1034 = vsub.s32 %v1031, %v1033
        %v1035 = vrot.slane %v1027, %v1034
        %v1037 = vunpack.c.l.s4 1934713408
        %v1038 = vunpack.c.0.s8 %v1037
        %v1039 = vlaneseq
        %v1040 = vshrl.u32 %v1039, 7
        %v1041 = vsub.s32 %v1038, %v1040
        %v1042 = vrot.slane %v1028, %v1041
        %v1043 = vcombine.low %v1010, %v1026
        %v1044 = vcombine.high %v1010, %v1026
        %v1046 = vunpack.c.l.s4 1934713408
        %v1047 = vunpack.c.0.s8 %v1046
        %v1048 = vlaneseq
        %v1049 = vshrl.u32 %v1048, 7
        %v1050 = vsub.s32 %v1047, %v1049
        %v1051 = vrot.slane %v1043, %v1050
        %v1053 = vunpack.c.l.s4 1934713408
        %v1054 = vunpack.c.0.s8 %v1053
        %v1055 = vlaneseq
        %v1056 = vshrl.u32 %v1055, 7
        %v1057 = vsub.s32 %v1054, %v1056
        %v1058 = vrot.slane %v1044, %v1057
        %v1059 = vcombine.high %v1035, 0.0
        %v1060 = vcombine.high %v1042, 0.0
        %v1061 = vcombine.high %v1051, 0.0
        %v1062 = vcombine.high %v1058, 0.0
        %v1063 = vcombine.low %v1035, %v1042
        %v1065 = vunpack.c.l.s4 1983009808
        %v1066 = vunpack.c.0.s8 %v1065
        %v1067 = vlaneseq
        %v1068 = vshrl.u32 %v1067, 7
        %v1069 = vsub.s32 %v1066, %v1068
        %v1070 = vrot.slane %v1063, %v1069
        %v1071 = vcombine.low %v1059, %v1060
        %v1073 = vunpack.c.l.s4 1983009808
        %v1074 = vunpack.c.0.s8 %v1073
        %v1075 = vlaneseq
        %v1076 = vshrl.u32 %v1075, 7
        %v1077 = vsub.s32 %v1074, %v1076
        %v1078 = vrot.slane %v1071, %v1077
        %v1079 = vcombine.low %v1051, %v1058
        %v1081 = vunpack.c.l.s4 1983009808
        %v1082 = vunpack.c.0.s8 %v1081
        %v1083 = vlaneseq
        %v1084 = vshrl.u32 %v1083, 7
        %v1085 = vsub.s32 %v1082, %v1084
        %v1086 = vrot.slane %v1079, %v1085
        %v1087 = vcombine.low %v1061, %v1062
        %v1089 = vunpack.c.l.s4 1983009808
        %v1090 = vunpack.c.0.s8 %v1089
        %v1091 = vlaneseq
        %v1092 = vshrl.u32 %v1091, 7
        %v1093 = vsub.s32 %v1090, %v1092
        %v1094 = vrot.slane %v1087, %v1093
        %v1095 = vcombine.low %v1070, %v1078
        %v1096 = vcombine.high %v1070, %v1078
        %v1098 = vunpack.c.l.s4 1934713408
        %v1099 = vunpack.c.0.s8 %v1098
        %v1100 = vlaneseq
        %v1101 = vshrl.u32 %v1100, 7
        %v1102 = vsub.s32 %v1099, %v1101
        %v1103 = vrot.slane %v1095, %v1102
        %v1105 = vunpack.c.l.s4 1934713408
        %v1106 = vunpack.c.0.s8 %v1105
        %v1107 = vlaneseq
        %v1108 = vshrl.u32 %v1107, 7
        %v1109 = vsub.s32 %v1106, %v1108
        %v1110 = vrot.slane %v1096, %v1109
        %v1111 = vcombine.low %v1086, %v1094
        %v1112 = vcombine.high %v1086, %v1094
        %v1114 = vunpack.c.l.s4 1934713408
        %v1115 = vunpack.c.0.s8 %v1114
        %v1116 = vlaneseq
        %v1117 = vshrl.u32 %v1116, 7
        %v1118 = vsub.s32 %v1115, %v1117
        %v1119 = vrot.slane %v1111, %v1118
        %v1121 = vunpack.c.l.s4 1934713408
        %v1122 = vunpack.c.0.s8 %v1121
        %v1123 = vlaneseq
        %v1124 = vshrl.u32 %v1123, 7
        %v1125 = vsub.s32 %v1122, %v1124
        %v1126 = vrot.slane %v1112, %v1125
        %v1127 = vcombine.low %v1103, %v1119
        %v1128 = vcombine.high %v1103, %v1119
        %v1129 = vcombine.low %v1110, %v1126
        %v1130 = vcombine.high %v1110, %v1126
        %v1131 = vpack.c.bf16 %v1127, %v1127
        %v1132 = vpack.c.bf16 %v1128, %v1128
        %v1133 = vpack.c.bf16 %v1129, %v1129
        %v1134 = vpack.c.bf16 %v1130, %v1130
        %v1135 = vld [vmem:[#allocation2] sm:$0xf]
        %v1136 = vld [vmem:[#allocation2 + $0x4] sm:$0xf]
        %v1137 = vld [vmem:[#allocation2 + $0x8] sm:$0xf]
        %v1138 = vld [vmem:[#allocation2 + $0xc] sm:$0xf]
        %vm1139 = vcmask 64512
        %v1141 = vsel %vm1139, %v1131, 0
        %v1144 = vsel %vm1139, %v1135, 0
        %1146 = vmatprep.subr.bf16.mxu0 0
        %1147 = vmatpush1.bf16.xpose.msra.mxu0 %v1144
        %1148 = vmatprep.subr.bf16.mxu0 0
        %1149 = vmatpush1.bf16.xpose.msra.mxu0 0
        %1150 = vmatprep.subr.bf16.mxu0 0
        %1151 = vmatpush1.bf16.xpose.msra.mxu0 0
        %1152 = vmatprep.subr.bf16.mxu0 0
        %1153 = vmatpush1.bf16.xpose.msra.mxu0 0
        %1154 = vmatprep.subr.bf16.mxu0 0
        %1155 = vmatpush1.bf16.xpose.msra.mxu0 0
        %1156 = vmatprep.subr.bf16.mxu0 0
        %1157 = vmatpush1.bf16.xpose.msra.mxu0 0
        %1158 = vmatprep.subr.bf16.mxu0 0
        %1159 = vmatpush1.bf16.xpose.msra.mxu0 0
        %1160 = vmatprep.subr.bf16.mxu0 0
        %1161 = vmatpush1.bf16.xpose.msra.mxu0 0
        %1162 = vmatprep.subr.bf16.mxu0 0
        %1163 = vmatpush1.bf16.xpose.msra.mxu0 0
        %1164 = vmatprep.subr.bf16.mxu0 0
        %1165 = vmatpush1.bf16.xpose.msra.mxu0 0
        %1166 = vmatprep.subr.bf16.mxu0 0
        %1167 = vmatpush1.bf16.xpose.msra.mxu0 0
        %1168 = vmatprep.subr.bf16.mxu0 0
        %1169 = vmatpush1.bf16.xpose.msra.mxu0 0
        %1170 = vmatprep.subr.bf16.mxu0 0
        %1171 = vmatpush1.bf16.xpose.msra.mxu0 0
        %1172 = vmatprep.subr.bf16.mxu0 0
        %1173 = vmatpush1.bf16.xpose.msra.mxu0 0
        %1174 = vmatprep.subr.bf16.mxu0 0
        %1175 = vmatpush1.bf16.xpose.msra.mxu0 0
        %1176 = vmatprep.subr.bf16.mxu0 0
        %1177 = vmatpush1.bf16.xpose.msra.mxu0 0
        %1178 = vmatprep.mubr.bf16.mxu0 0
        %1179 = vmatmul.mubr.bf16.gmra.mrb[0].mxu0 %v1141
        %v1180 = vpop.f32.mrb[0].mxu0
        %v1181 = vadd.f32 0.0, %v1180
        %v1182 = vpop.f32.mrb[0].mxu0
        %v1183 = vpop.f32.mrb[0].mxu0
        %v1184 = vpop.f32.mrb[0].mxu0
        %1185 = vdwg.mxu0
        %v1187 = vsel %vm1139, %v1132, 0
        %v1190 = vsel %vm1139, %v1136, 0
        %1192 = vmatprep.subr.bf16.mxu0 0
        %1193 = vmatpush1.bf16.xpose.msra.mxu0 %v1190
        %1194 = vmatprep.subr.bf16.mxu0 0
        %1195 = vmatpush1.bf16.xpose.msra.mxu0 0
        %1196 = vmatprep.subr.bf16.mxu0 0
        %1197 = vmatpush1.bf16.xpose.msra.mxu0 0
        %1198 = vmatprep.subr.bf16.mxu0 0
        %1199 = vmatpush1.bf16.xpose.msra.mxu0 0
        %1200 = vmatprep.subr.bf16.mxu0 0
        %1201 = vmatpush1.bf16.xpose.msra.mxu0 0
        %1202 = vmatprep.subr.bf16.mxu0 0
        %1203 = vmatpush1.bf16.xpose.msra.mxu0 0
        %1204 = vmatprep.subr.bf16.mxu0 0
        %1205 = vmatpush1.bf16.xpose.msra.mxu0 0
        %1206 = vmatprep.subr.bf16.mxu0 0
        %1207 = vmatpush1.bf16.xpose.msra.mxu0 0
        %1208 = vmatprep.subr.bf16.mxu0 0
        %1209 = vmatpush1.bf16.xpose.msra.mxu0 0
        %1210 = vmatprep.subr.bf16.mxu0 0
        %1211 = vmatpush1.bf16.xpose.msra.mxu0 0
        %1212 = vmatprep.subr.bf16.mxu0 0
        %1213 = vmatpush1.bf16.xpose.msra.mxu0 0
        %1214 = vmatprep.subr.bf16.mxu0 0
        %1215 = vmatpush1.bf16.xpose.msra.mxu0 0
        %1216 = vmatprep.subr.bf16.mxu0 0
        %1217 = vmatpush1.bf16.xpose.msra.mxu0 0
        %1218 = vmatprep.subr.bf16.mxu0 0
        %1219 = vmatpush1.bf16.xpose.msra.mxu0 0
        %1220 = vmatprep.subr.bf16.mxu0 0
        %1221 = vmatpush1.bf16.xpose.msra.mxu0 0
        %1222 = vmatprep.subr.bf16.mxu0 0
        %1223 = vmatpush1.bf16.xpose.msra.mxu0 0
        %1224 = vmatprep.mubr.bf16.mxu0 0
        %1225 = vmatmul.mubr.bf16.gmra.mrb[0].mxu0 %v1187
        %v1226 = vpop.f32.mrb[0].mxu0
        %v1227 = vadd.f32 0.0, %v1226
        %v1228 = vpop.f32.mrb[0].mxu0
        %v1229 = vpop.f32.mrb[0].mxu0
        %v1230 = vpop.f32.mrb[0].mxu0
        %1231 = vdwg.mxu0
        %v1233 = vsel %vm1139, %v1133, 0
        %v1236 = vsel %vm1139, %v1137, 0
        %1238 = vmatprep.subr.bf16.mxu0 0
        %1239 = vmatpush1.bf16.xpose.msra.mxu0 %v1236
        %1240 = vmatprep.subr.bf16.mxu0 0
        %1241 = vmatpush1.bf16.xpose.msra.mxu0 0
        %1242 = vmatprep.subr.bf16.mxu0 0
        %1243 = vmatpush1.bf16.xpose.msra.mxu0 0
        %1244 = vmatprep.subr.bf16.mxu0 0
        %1245 = vmatpush1.bf16.xpose.msra.mxu0 0
        %1246 = vmatprep.subr.bf16.mxu0 0
        %1247 = vmatpush1.bf16.xpose.msra.mxu0 0
        %1248 = vmatprep.subr.bf16.mxu0 0
        %1249 = vmatpush1.bf16.xpose.msra.mxu0 0
        %1250 = vmatprep.subr.bf16.mxu0 0
        %1251 = vmatpush1.bf16.xpose.msra.mxu0 0
        %1252 = vmatprep.subr.bf16.mxu0 0
        %1253 = vmatpush1.bf16.xpose.msra.mxu0 0
        %1254 = vmatprep.subr.bf16.mxu0 0
        %1255 = vmatpush1.bf16.xpose.msra.mxu0 0
        %1256 = vmatprep.subr.bf16.mxu0 0
        %1257 = vmatpush1.bf16.xpose.msra.mxu0 0
        %1258 = vmatprep.subr.bf16.mxu0 0
        %1259 = vmatpush1.bf16.xpose.msra.mxu0 0
        %1260 = vmatprep.subr.bf16.mxu0 0
        %1261 = vmatpush1.bf16.xpose.msra.mxu0 0
        %1262 = vmatprep.subr.bf16.mxu0 0
        %1263 = vmatpush1.bf16.xpose.msra.mxu0 0
        %1264 = vmatprep.subr.bf16.mxu0 0
        %1265 = vmatpush1.bf16.xpose.msra.mxu0 0
        %1266 = vmatprep.subr.bf16.mxu0 0
        %1267 = vmatpush1.bf16.xpose.msra.mxu0 0
        %1268 = vmatprep.subr.bf16.mxu0 0
        %1269 = vmatpush1.bf16.xpose.msra.mxu0 0
        %1270 = vmatprep.mubr.bf16.mxu0 0
        %1271 = vmatmul.mubr.bf16.gmra.mrb[0].mxu0 %v1233
        %v1272 = vpop.f32.mrb[0].mxu0
        %v1273 = vadd.f32 0.0, %v1272
        %v1274 = vpop.f32.mrb[0].mxu0
        %v1275 = vpop.f32.mrb[0].mxu0
        %v1276 = vpop.f32.mrb[0].mxu0
        %1277 = vdwg.mxu0
        %v1279 = vsel %vm1139, %v1134, 0
        %v1282 = vsel %vm1139, %v1138, 0
        %1284 = vmatprep.subr.bf16.mxu0 0
        %1285 = vmatpush1.bf16.xpose.msra.mxu0 %v1282
        %1286 = vmatprep.subr.bf16.mxu0 0
        %1287 = vmatpush1.bf16.xpose.msra.mxu0 0
        %1288 = vmatprep.subr.bf16.mxu0 0
        %1289 = vmatpush1.bf16.xpose.msra.mxu0 0
        %1290 = vmatprep.subr.bf16.mxu0 0
        %1291 = vmatpush1.bf16.xpose.msra.mxu0 0
        %1292 = vmatprep.subr.bf16.mxu0 0
        %1293 = vmatpush1.bf16.xpose.msra.mxu0 0
        %1294 = vmatprep.subr.bf16.mxu0 0
        %1295 = vmatpush1.bf16.xpose.msra.mxu0 0
        %1296 = vmatprep.subr.bf16.mxu0 0
        %1297 = vmatpush1.bf16.xpose.msra.mxu0 0
        %1298 = vmatprep.subr.bf16.mxu0 0
        %1299 = vmatpush1.bf16.xpose.msra.mxu0 0
        %1300 = vmatprep.subr.bf16.mxu0 0
        %1301 = vmatpush1.bf16.xpose.msra.mxu0 0
        %1302 = vmatprep.subr.bf16.mxu0 0
        %1303 = vmatpush1.bf16.xpose.msra.mxu0 0
        %1304 = vmatprep.subr.bf16.mxu0 0
        %1305 = vmatpush1.bf16.xpose.msra.mxu0 0
        %1306 = vmatprep.subr.bf16.mxu0 0
        %1307 = vmatpush1.bf16.xpose.msra.mxu0 0
        %1308 = vmatprep.subr.bf16.mxu0 0
        %1309 = vmatpush1.bf16.xpose.msra.mxu0 0
        %1310 = vmatprep.subr.bf16.mxu0 0
        %1311 = vmatpush1.bf16.xpose.msra.mxu0 0
        %1312 = vmatprep.subr.bf16.mxu0 0
        %1313 = vmatpush1.bf16.xpose.msra.mxu0 0
        %1314 = vmatprep.subr.bf16.mxu0 0
        %1315 = vmatpush1.bf16.xpose.msra.mxu0 0
        %1316 = vmatprep.mubr.bf16.mxu0 0
        %1317 = vmatmul.mubr.bf16.gmra.mrb[0].mxu0 %v1279
        %v1318 = vpop.f32.mrb[0].mxu0
        %v1319 = vadd.f32 0.0, %v1318
        %v1320 = vpop.f32.mrb[0].mxu0
        %v1321 = vpop.f32.mrb[0].mxu0
        %v1322 = vpop.f32.mrb[0].mxu0
        %1323 = vdwg.mxu0
        %v1324 = vsel %vm1139, %v1181, -inf
        %1325 = vmax.xlane.f32.xlu0 %v1324
        %v1326 = vpop.xlane.xlu0 %1325
        %v1327 = vsel %vm1139, %v1227, -inf
        %1328 = vmax.xlane.f32.xlu0 %v1327
        %v1329 = vpop.xlane.xlu0 %1328
        %v1330 = vsel %vm1139, %v1273, -inf
        %1331 = vmax.xlane.f32.xlu0 %v1330
        %v1332 = vpop.xlane.xlu0 %1331
        %v1333 = vsel %vm1139, %v1319, -inf
        %1334 = vmax.xlane.f32.xlu0 %v1333
        %v1335 = vpop.xlane.xlu0 %1334
        %v1336 = vsub.f32 %v1181, %v1326
        %v1337 = vsub.f32 %v1227, %v1329
        %v1338 = vsub.f32 %v1273, %v1332
        %v1339 = vsub.f32 %v1319, %v1335
        %v1340 = vmul.f32 %v1336, 1.442695
        %v1341 = vpow.pop %v1340
        %v1342 = vmul.f32 %v1337, 1.442695
        %v1343 = vpow.pop %v1342
        %v1344 = vmul.f32 %v1338, 1.442695
        %v1345 = vpow.pop %v1344
        %v1346 = vmul.f32 %v1339, 1.442695
        %v1347 = vpow.pop %v1346
        %v1348 = vsel %vm1139, %v1341, 0.0
        %1349 = vadd.xlane.f32.xlu0 %v1348
        %v1350 = vpop.xlane.xlu0 %1349
        %v1351 = vsel %vm1139, %v1343, 0.0
        %1352 = vadd.xlane.f32.xlu0 %v1351
        %v1353 = vpop.xlane.xlu0 %1352
        %v1354 = vsel %vm1139, %v1345, 0.0
        %1355 = vadd.xlane.f32.xlu0 %v1354
        %v1356 = vpop.xlane.xlu0 %1355
        %v1357 = vsel %vm1139, %v1347, 0.0
        %1358 = vadd.xlane.f32.xlu0 %v1357
        %v1359 = vpop.xlane.xlu0 %1358
        %v1360 = vpack.c.bf16 %v1341, %v1341
        %v1361 = vpack.c.bf16 %v1343, %v1343
        %v1362 = vpack.c.bf16 %v1345, %v1345
        %v1363 = vpack.c.bf16 %v1347, %v1347
        %v1364 = vld [vmem:[#allocation3] sm:$0xf]
        %v1365 = vld [vmem:[#allocation3 + $0x4] sm:$0xf]
        %v1366 = vld [vmem:[#allocation3 + $0x8] sm:$0xf]
        %v1367 = vld [vmem:[#allocation3 + $0xc] sm:$0xf]
        %v1369 = vsel %vm1139, %v1360, 0
        %vm1371 = vcmask 1043456
        %v1373 = vsel %vm1371, %v1364, 0
        %1375 = vmatprep.subr.bf16.mxu0 0
        %1376 = vmatpush1.bf16.msra.mxu0 %v1373
        %1377 = vmatprep.subr.bf16.mxu0 0
        %1378 = vmatpush1.bf16.msra.mxu0 0
        %1379 = vmatprep.subr.bf16.mxu0 0
        %1380 = vmatpush1.bf16.msra.mxu0 0
        %1381 = vmatprep.subr.bf16.mxu0 0
        %1382 = vmatpush1.bf16.msra.mxu0 0
        %1383 = vmatprep.subr.bf16.mxu0 0
        %1384 = vmatpush1.bf16.msra.mxu0 0
        %1385 = vmatprep.subr.bf16.mxu0 0
        %1386 = vmatpush1.bf16.msra.mxu0 0
        %1387 = vmatprep.subr.bf16.mxu0 0
        %1388 = vmatpush1.bf16.msra.mxu0 0
        %1389 = vmatprep.subr.bf16.mxu0 0
        %1390 = vmatpush1.bf16.msra.mxu0 0
        %1391 = vmatprep.subr.bf16.mxu0 0
        %1392 = vmatpush1.bf16.msra.mxu0 0
        %1393 = vmatprep.subr.bf16.mxu0 0
        %1394 = vmatpush1.bf16.msra.mxu0 0
        %1395 = vmatprep.subr.bf16.mxu0 0
        %1396 = vmatpush1.bf16.msra.mxu0 0
        %1397 = vmatprep.subr.bf16.mxu0 0
        %1398 = vmatpush1.bf16.msra.mxu0 0
        %1399 = vmatprep.subr.bf16.mxu0 0
        %1400 = vmatpush1.bf16.msra.mxu0 0
        %1401 = vmatprep.subr.bf16.mxu0 0
        %1402 = vmatpush1.bf16.msra.mxu0 0
        %1403 = vmatprep.subr.bf16.mxu0 0
        %1404 = vmatpush1.bf16.msra.mxu0 0
        %1405 = vmatprep.subr.bf16.mxu0 0
        %1406 = vmatpush1.bf16.msra.mxu0 0
        %1407 = vmatprep.mubr.bf16.mxu0 0
        %1408 = vmatmul.mubr.bf16.gmra.mrb[0].mxu0 %v1369
        %v1409 = vpop.f32.mrb[0].mxu0
        %v1410 = vadd.f32 0.0, %v1409
        %v1411 = vpop.f32.mrb[0].mxu0
        %v1412 = vpop.f32.mrb[0].mxu0
        %v1413 = vpop.f32.mrb[0].mxu0
        %1414 = vdwg.mxu0
        %v1416 = vsel %vm1139, %v1361, 0
        %v1419 = vsel %vm1371, %v1365, 0
        %1421 = vmatprep.subr.bf16.mxu0 0
        %1422 = vmatpush1.bf16.msra.mxu0 %v1419
        %1423 = vmatprep.subr.bf16.mxu0 0
        %1424 = vmatpush1.bf16.msra.mxu0 0
        %1425 = vmatprep.subr.bf16.mxu0 0
        %1426 = vmatpush1.bf16.msra.mxu0 0
        %1427 = vmatprep.subr.bf16.mxu0 0
        %1428 = vmatpush1.bf16.msra.mxu0 0
        %1429 = vmatprep.subr.bf16.mxu0 0
        %1430 = vmatpush1.bf16.msra.mxu0 0
        %1431 = vmatprep.subr.bf16.mxu0 0
        %1432 = vmatpush1.bf16.msra.mxu0 0
        %1433 = vmatprep.subr.bf16.mxu0 0
        %1434 = vmatpush1.bf16.msra.mxu0 0
        %1435 = vmatprep.subr.bf16.mxu0 0
        %1436 = vmatpush1.bf16.msra.mxu0 0
        %1437 = vmatprep.subr.bf16.mxu0 0
        %1438 = vmatpush1.bf16.msra.mxu0 0
        %1439 = vmatprep.subr.bf16.mxu0 0
        %1440 = vmatpush1.bf16.msra.mxu0 0
        %1441 = vmatprep.subr.bf16.mxu0 0
        %1442 = vmatpush1.bf16.msra.mxu0 0
        %1443 = vmatprep.subr.bf16.mxu0 0
        %1444 = vmatpush1.bf16.msra.mxu0 0
        %1445 = vmatprep.subr.bf16.mxu0 0
        %1446 = vmatpush1.bf16.msra.mxu0 0
        %1447 = vmatprep.subr.bf16.mxu0 0
        %1448 = vmatpush1.bf16.msra.mxu0 0
        %1449 = vmatprep.subr.bf16.mxu0 0
        %1450 = vmatpush1.bf16.msra.mxu0 0
        %1451 = vmatprep.subr.bf16.mxu0 0
        %1452 = vmatpush1.bf16.msra.mxu0 0
        %1453 = vmatprep.mubr.bf16.mxu0 0
        %1454 = vmatmul.mubr.bf16.gmra.mrb[0].mxu0 %v1416
        %v1455 = vpop.f32.mrb[0].mxu0
        %v1456 = vadd.f32 0.0, %v1455
        %v1457 = vpop.f32.mrb[0].mxu0
        %v1458 = vpop.f32.mrb[0].mxu0
        %v1459 = vpop.f32.mrb[0].mxu0
        %1460 = vdwg.mxu0
        %v1462 = vsel %vm1139, %v1362, 0
        %v1465 = vsel %vm1371, %v1366, 0
        %1467 = vmatprep.subr.bf16.mxu0 0
        %1468 = vmatpush1.bf16.msra.mxu0 %v1465
        %1469 = vmatprep.subr.bf16.mxu0 0
        %1470 = vmatpush1.bf16.msra.mxu0 0
        %1471 = vmatprep.subr.bf16.mxu0 0
        %1472 = vmatpush1.bf16.msra.mxu0 0
        %1473 = vmatprep.subr.bf16.mxu0 0
        %1474 = vmatpush1.bf16.msra.mxu0 0
        %1475 = vmatprep.subr.bf16.mxu0 0
        %1476 = vmatpush1.bf16.msra.mxu0 0
        %1477 = vmatprep.subr.bf16.mxu0 0
        %1478 = vmatpush1.bf16.msra.mxu0 0
        %1479 = vmatprep.subr.bf16.mxu0 0
        %1480 = vmatpush1.bf16.msra.mxu0 0
        %1481 = vmatprep.subr.bf16.mxu0 0
        %1482 = vmatpush1.bf16.msra.mxu0 0
        %1483 = vmatprep.subr.bf16.mxu0 0
        %1484 = vmatpush1.bf16.msra.mxu0 0
        %1485 = vmatprep.subr.bf16.mxu0 0
        %1486 = vmatpush1.bf16.msra.mxu0 0
        %1487 = vmatprep.subr.bf16.mxu0 0
        %1488 = vmatpush1.bf16.msra.mxu0 0
        %1489 = vmatprep.subr.bf16.mxu0 0
        %1490 = vmatpush1.bf16.msra.mxu0 0
        %1491 = vmatprep.subr.bf16.mxu0 0
        %1492 = vmatpush1.bf16.msra.mxu0 0
        %1493 = vmatprep.subr.bf16.mxu0 0
        %1494 = vmatpush1.bf16.msra.mxu0 0
        %1495 = vmatprep.subr.bf16.mxu0 0
        %1496 = vmatpush1.bf16.msra.mxu0 0
        %1497 = vmatprep.subr.bf16.mxu0 0
        %1498 = vmatpush1.bf16.msra.mxu0 0
        %1499 = vmatprep.mubr.bf16.mxu0 0
        %1500 = vmatmul.mubr.bf16.gmra.mrb[0].mxu0 %v1462
        %v1501 = vpop.f32.mrb[0].mxu0
        %v1502 = vadd.f32 0.0, %v1501
        %v1503 = vpop.f32.mrb[0].mxu0
        %v1504 = vpop.f32.mrb[0].mxu0
        %v1505 = vpop.f32.mrb[0].mxu0
        %1506 = vdwg.mxu0
        %v1508 = vsel %vm1139, %v1363, 0
        %v1511 = vsel %vm1371, %v1367, 0
        %1513 = vmatprep.subr.bf16.mxu0 0
        %1514 = vmatpush1.bf16.msra.mxu0 %v1511
        %1515 = vmatprep.subr.bf16.mxu0 0
        %1516 = vmatpush1.bf16.msra.mxu0 0
        %1517 = vmatprep.subr.bf16.mxu0 0
        %1518 = vmatpush1.bf16.msra.mxu0 0
        %1519 = vmatprep.subr.bf16.mxu0 0
        %1520 = vmatpush1.bf16.msra.mxu0 0
        %1521 = vmatprep.subr.bf16.mxu0 0
        %1522 = vmatpush1.bf16.msra.mxu0 0
        %1523 = vmatprep.subr.bf16.mxu0 0
        %1524 = vmatpush1.bf16.msra.mxu0 0
        %1525 = vmatprep.subr.bf16.mxu0 0
        %1526 = vmatpush1.bf16.msra.mxu0 0
        %1527 = vmatprep.subr.bf16.mxu0 0
        %1528 = vmatpush1.bf16.msra.mxu0 0
        %1529 = vmatprep.subr.bf16.mxu0 0
        %1530 = vmatpush1.bf16.msra.mxu0 0
        %1531 = vmatprep.subr.bf16.mxu0 0
        %1532 = vmatpush1.bf16.msra.mxu0 0
        %1533 = vmatprep.subr.bf16.mxu0 0
        %1534 = vmatpush1.bf16.msra.mxu0 0
        %1535 = vmatprep.subr.bf16.mxu0 0
        %1536 = vmatpush1.bf16.msra.mxu0 0
        %1537 = vmatprep.subr.bf16.mxu0 0
        %1538 = vmatpush1.bf16.msra.mxu0 0
        %1539 = vmatprep.subr.bf16.mxu0 0
        %1540 = vmatpush1.bf16.msra.mxu0 0
        %1541 = vmatprep.subr.bf16.mxu0 0
        %1542 = vmatpush1.bf16.msra.mxu0 0
        %1543 = vmatprep.subr.bf16.mxu0 0
        %1544 = vmatpush1.bf16.msra.mxu0 0
        %1545 = vmatprep.mubr.bf16.mxu0 0
        %1546 = vmatmul.mubr.bf16.gmra.mrb[0].mxu0 %v1508
        %v1547 = vpop.f32.mrb[0].mxu0
        %v1548 = vadd.f32 0.0, %v1547
        %v1549 = vpop.f32.mrb[0].mxu0
        %v1550 = vpop.f32.mrb[0].mxu0
        %v1551 = vpop.f32.mrb[0].mxu0
        %1552 = vdwg.mxu0
        %v1553 = vrcp.pop %v1350
        %v1554 = vrcp.pop %v1353
        %v1555 = vrcp.pop %v1356
        %v1556 = vrcp.pop %v1359
        %v1557 = vmul.f32 %v1410, %v1553
        %v1558 = vmul.f32 %v1456, %v1554
        %v1559 = vmul.f32 %v1502, %v1555
        %v1560 = vmul.f32 %v1548, %v1556
        %v1561 = vcombine.low %v1557, %v1559
        %v1562 = vcombine.high %v1557, %v1559
        %v1564 = vunpack.c.l.s4 1983009808
        %v1565 = vunpack.c.0.s8 %v1564
        %v1566 = vlaneseq
        %v1567 = vshrl.u32 %v1566, 7
        %v1568 = vsub.s32 %v1565, %v1567
        %v1569 = vrot.slane %v1561, %v1568
        %v1571 = vunpack.c.l.s4 1983009808
        %v1572 = vunpack.c.0.s8 %v1571
        %v1573 = vlaneseq
        %v1574 = vshrl.u32 %v1573, 7
        %v1575 = vsub.s32 %v1572, %v1574
        %v1576 = vrot.slane %v1562, %v1575
        %v1577 = vcombine.low %v1558, %v1560
        %v1578 = vcombine.high %v1558, %v1560
        %v1580 = vunpack.c.l.s4 1983009808
        %v1581 = vunpack.c.0.s8 %v1580
        %v1582 = vlaneseq
        %v1583 = vshrl.u32 %v1582, 7
        %v1584 = vsub.s32 %v1581, %v1583
        %v1585 = vrot.slane %v1577, %v1584
        %v1587 = vunpack.c.l.s4 1983009808
        %v1588 = vunpack.c.0.s8 %v1587
        %v1589 = vlaneseq
        %v1590 = vshrl.u32 %v1589, 7
        %v1591 = vsub.s32 %v1588, %v1590
        %v1592 = vrot.slane %v1578, %v1591
        %v1593 = vcombine.low %v1569, %v1585
        %v1594 = vcombine.high %v1569, %v1585
        %v1596 = vunpack.c.l.s4 1934713408
        %v1597 = vunpack.c.0.s8 %v1596
        %v1598 = vlaneseq
        %v1599 = vshrl.u32 %v1598, 7
        %v1600 = vsub.s32 %v1597, %v1599
        %v1601 = vrot.slane %v1593, %v1600
        %v1603 = vunpack.c.l.s4 1934713408
        %v1604 = vunpack.c.0.s8 %v1603
        %v1605 = vlaneseq
        %v1606 = vshrl.u32 %v1605, 7
        %v1607 = vsub.s32 %v1604, %v1606
        %v1608 = vrot.slane %v1594, %v1607
        %v1609 = vcombine.low %v1576, %v1592
        %v1610 = vcombine.high %v1576, %v1592
        %v1612 = vunpack.c.l.s4 1934713408
        %v1613 = vunpack.c.0.s8 %v1612
        %v1614 = vlaneseq
        %v1615 = vshrl.u32 %v1614, 7
        %v1616 = vsub.s32 %v1613, %v1615
        %v1617 = vrot.slane %v1609, %v1616
        %v1619 = vunpack.c.l.s4 1934713408
        %v1620 = vunpack.c.0.s8 %v1619
        %v1621 = vlaneseq
        %v1622 = vshrl.u32 %v1621, 7
        %v1623 = vsub.s32 %v1620, %v1622
        %v1624 = vrot.slane %v1610, %v1623
        %v1625 = vcombine.high %v1601, 0.0
        %v1626 = vcombine.high %v1608, 0.0
        %v1627 = vcombine.high %v1617, 0.0
        %v1628 = vcombine.high %v1624, 0.0
        %v1629 = vcombine.low %v1601, %v1608
        %v1631 = vunpack.c.l.s4 1983009808
        %v1632 = vunpack.c.0.s8 %v1631
        %v1633 = vlaneseq
        %v1634 = vshrl.u32 %v1633, 7
        %v1635 = vsub.s32 %v1632, %v1634
        %v1636 = vrot.slane %v1629, %v1635
        %v1637 = vcombine.low %v1625, %v1626
        %v1639 = vunpack.c.l.s4 1983009808
        %v1640 = vunpack.c.0.s8 %v1639
        %v1641 = vlaneseq
        %v1642 = vshrl.u32 %v1641, 7
        %v1643 = vsub.s32 %v1640, %v1642
        %v1644 = vrot.slane %v1637, %v1643
        %v1645 = vcombine.low %v1617, %v1624
        %v1647 = vunpack.c.l.s4 1983009808
        %v1648 = vunpack.c.0.s8 %v1647
        %v1649 = vlaneseq
        %v1650 = vshrl.u32 %v1649, 7
        %v1651 = vsub.s32 %v1648, %v1650
        %v1652 = vrot.slane %v1645, %v1651
        %v1653 = vcombine.low %v1627, %v1628
        %v1655 = vunpack.c.l.s4 1983009808
        %v1656 = vunpack.c.0.s8 %v1655
        %v1657 = vlaneseq
        %v1658 = vshrl.u32 %v1657, 7
        %v1659 = vsub.s32 %v1656, %v1658
        %v1660 = vrot.slane %v1653, %v1659
        %v1661 = vcombine.low %v1636, %v1644
        %v1662 = vcombine.high %v1636, %v1644
        %v1664 = vunpack.c.l.s4 1934713408
        %v1665 = vunpack.c.0.s8 %v1664
        %v1666 = vlaneseq
        %v1667 = vshrl.u32 %v1666, 7
        %v1668 = vsub.s32 %v1665, %v1667
        %v1669 = vrot.slane %v1661, %v1668
        %v1671 = vunpack.c.l.s4 1934713408
        %v1672 = vunpack.c.0.s8 %v1671
        %v1673 = vlaneseq
        %v1674 = vshrl.u32 %v1673, 7
        %v1675 = vsub.s32 %v1672, %v1674
        %v1676 = vrot.slane %v1662, %v1675
        %v1677 = vcombine.low %v1652, %v1660
        %v1678 = vcombine.high %v1652, %v1660
        %v1680 = vunpack.c.l.s4 1934713408
        %v1681 = vunpack.c.0.s8 %v1680
        %v1682 = vlaneseq
        %v1683 = vshrl.u32 %v1682, 7
        %v1684 = vsub.s32 %v1681, %v1683
        %v1685 = vrot.slane %v1677, %v1684
        %v1687 = vunpack.c.l.s4 1934713408
        %v1688 = vunpack.c.0.s8 %v1687
        %v1689 = vlaneseq
        %v1690 = vshrl.u32 %v1689, 7
        %v1691 = vsub.s32 %v1688, %v1690
        %v1692 = vrot.slane %v1678, %v1691
        %v1693 = vcombine.low %v1669, %v1685
        %v1694 = vcombine.high %v1669, %v1685
        %v1695 = vcombine.low %v1676, %v1692
        %v1696 = vcombine.high %v1676, %v1692
        %1698 = vrot.lane.b32.xlu0 %v1694, 8
        %v1699 = vpop.permute.xlu0 %1698
        %1702 = vrot.lane.b32.xlu0 %v1695, 16
        %v1703 = vpop.permute.xlu0 %1702
        %1706 = vrot.lane.b32.xlu0 %v1696, 24
        %v1707 = vpop.permute.xlu0 %1706
        %v1709 = vsel %vm1139, %v1693, %v1699
        %vm1710 = vcmask 130048
        %v1711 = vsel %vm1710, %v1709, %v1703
        %vm1712 = vcmask 195584
        %v1713 = vsel %vm1712, %v1711, %v1707
        %v1714 = vpack.c.bf16 %v1713, %v1713
        %v1715 = vld [vmem:[#allocation12] sm:$0xf]
        %v1716 = vld [vmem:[#allocation12 + $0x4] sm:$0xf]
        %v1717 = vld [vmem:[#allocation12 + $0x8] sm:$0xf]
        %v1718 = vld [vmem:[#allocation12 + $0xc] sm:$0xf]
        %v1719 = vld [vmem:[%s9] sm:$0x1]
        %v1721 = vlaneseq
        %v1722 = vshrl.u32 %v1721, 7
        %v1723 = vsub.s32 0, %v1722
        %v1724 = vrot.slane %v1719, %v1723
        %v1730 = vunpack.c.l.b16 %v1715
        %v1731 = vunpack.c.l.b16 %v1716
        %v1732 = vunpack.c.l.b16 %v1717
        %v1733 = vunpack.c.l.b16 %v1718
        %v1734 = vpack.c.b16 %v1731, %v1730
        %v1735 = vpack.c.b16 %v1733, %v1732
        %v1739 = vsel %vm941, %v1714, 0
        %1741 = vmatprep.subr.bf16.mxu0 0
        %1742 = vmatpush1.bf16.msra.mxu0 %v1734
        %1743 = vmatprep.subr.bf16.mxu0 0
        %1744 = vmatpush1.bf16.msra.mxu0 %v1735
        %1745 = vmatprep.subr.bf16.mxu0 0
        %1746 = vmatpush1.bf16.msra.mxu0 0
        %1747 = vmatprep.subr.bf16.mxu0 0
        %1748 = vmatpush1.bf16.msra.mxu0 0
        %1749 = vmatprep.subr.bf16.mxu0 0
        %1750 = vmatpush1.bf16.msra.mxu0 0
        %1751 = vmatprep.subr.bf16.mxu0 0
        %1752 = vmatpush1.bf16.msra.mxu0 0
        %1753 = vmatprep.subr.bf16.mxu0 0
        %1754 = vmatpush1.bf16.msra.mxu0 0
        %1755 = vmatprep.subr.bf16.mxu0 0
        %1756 = vmatpush1.bf16.msra.mxu0 0
        %1757 = vmatprep.subr.bf16.mxu0 0
        %1758 = vmatpush1.bf16.msra.mxu0 0
        %1759 = vmatprep.subr.bf16.mxu0 0
        %1760 = vmatpush1.bf16.msra.mxu0 0
        %1761 = vmatprep.subr.bf16.mxu0 0
        %1762 = vmatpush1.bf16.msra.mxu0 0
        %1763 = vmatprep.subr.bf16.mxu0 0
        %1764 = vmatpush1.bf16.msra.mxu0 0
        %1765 = vmatprep.subr.bf16.mxu0 0
        %1766 = vmatpush1.bf16.msra.mxu0 0
        %1767 = vmatprep.subr.bf16.mxu0 0
        %1768 = vmatpush1.bf16.msra.mxu0 0
        %1769 = vmatprep.subr.bf16.mxu0 0
        %1770 = vmatpush1.bf16.msra.mxu0 0
        %1771 = vmatprep.subr.bf16.mxu0 0
        %1772 = vmatpush1.bf16.msra.mxu0 0
        %1773 = vmatprep.mubr.bf16.mxu0 0
        %1774 = vmatmul.mubr.bf16.gmra.mrb[0].mxu0 %v1739
        %v1775 = vpop.f32.mrb[0].mxu0
        %v1776 = vadd.f32 %v1724, %v1775
        %v1777 = vpop.f32.mrb[0].mxu0
        %v1778 = vpop.f32.mrb[0].mxu0
        %v1779 = vpop.f32.mrb[0].mxu0
        %1780 = vdwg.mxu0
        %1781 = vst.msk [vmem:[%s471] sm:$0xff] %vm941, %v1776
        %s1782 = sand.u32 %s275, 1
        %s1783 = scalar_lea.sflag [#allocation6], %s1782
        %s1784 = sand.u32 %s275, 1
        %s1785 = smul.addr %s1784, 8
        %s1786 = scalar_lea.vmem [#allocation13], %s1785
        // Predicated region
        $region85: #{tpu_custom_call.1} parent=59 // pred_check
          %p1787 = pneg %p285
        $region86: #{tpu_custom_call.1} parent=59 // pred_check_branch
          %1789 = sbr.rel (%p1787) target = $region88
        $region87: #{tpu_custom_call.1} parent=59 // pred_region
          %s1791 = ssub.s32 128, 128
          %1792 = vsyncadd %s1783, %s1791
          %s1793 = sadd.s32 %s36, %s35
          %s1794 = smul.addr %s1793, 128
          %s1795 = scalar_lea.hbm %s10, %s1794
          %s1797 = sshll.u32 %s1786, 4
          %s1798 = int_to_ptr.vmem [resolvable:$true] %s1797
          %1800 = dma.vmem_to_hbm [thread:$0]  %s1798, 128, %s1795, %s1783
        $region88: #{tpu_custom_call.1} parent=59 // pred_fallthru
          _
      $region60: #{tpu_custom_call.1} parent=5 // pred_fallthru
        _
      %p1801 = scmp.le.s32.totalorder 2, %s26
      // Predicated region
      $region89: #{tpu_custom_call.1} parent=5 // pred_check
        %p1802 = pneg %p1801
      $region90: #{tpu_custom_call.1} parent=5 // pred_check_branch
        %1804 = sbr.rel (%p1802) target = $region92
      $region91: #{tpu_custom_call.1} parent=5 // pred_region
        %s1805 = ssub.s32 %s26, 2
        // Predicated region
        $region93: #{tpu_custom_call.1} parent=91 // pred_check
          %p1806 = pneg %p291
        $region94: #{tpu_custom_call.1} parent=91 // pred_check_branch
          %1808 = sbr.rel (%p1806) target = $region96
        $region95: #{tpu_custom_call.1} parent=91 // pred_region
          %s1809 = sand.u32 %s276, 1
          %s1810 = scalar_lea.sflag [#allocation6], %s1809
          %s1811 = sand.u32 %s276, 1
          %s1812 = smul.addr %s1811, 8
          %s1813 = scalar_lea.vmem [#allocation13], %s1812
          %1814 = dma.done %s1810, 128
        $region96: #{tpu_custom_call.1} parent=91 // pred_fallthru
          _
      $region92: #{tpu_custom_call.1} parent=5 // pred_fallthru
        _
    $region6: #{tpu_custom_call.1} parent=1 // loop_footer
      %s30 = sadd.s32 1, %s26
    $region7: #{tpu_custom_call.1} parent=1 // loop_footer_branch
      %25 = sbr.rel target = $region3
    $region8: #{tpu_custom_call.1} parent=1 // loop_exit
      _
    %1815 = vsyncpa [#allocation5], 1
    %s1816 = scalar_lea.sflag [#allocation5], 1
    %1817 = vsyncpa %s1816, 1
    %1818 = vsyncpa [#allocation8], 1
    %s1819 = scalar_lea.sflag [#allocation8], 1
    %1820 = vsyncpa %s1819, 1
    %1821 = vsyncpa [#allocation11], 1
    %1822 = vsyncpa [#allocation6], 1
    %s1823 = scalar_lea.sflag [#allocation6], 1
    %1824 = vsyncpa %s1823, 1

</llo_original>
